<compile_context>
chip_gen: v7x
topology: tpu7x:2x2x1
jax: 0.10.0
libtpu: 0.0.40
codegen_flags: <defaults>
</compile_context>

<pallas_src>
import functools

import jax
import jax.numpy as jnp
from jax.experimental import pallas as pl
from jax.experimental.pallas import tpu as pltpu


_SUB_ROWS = 256  # in-kernel sub-tile height (vreg working set)


def _round_up(n, m):
    return ((n + m - 1) // m) * m


def _pad2d(a, rows, cols):
    return jnp.pad(a, ((0, rows - a.shape[0]), (0, cols - a.shape[1])))


def dqn_kernel(x_ref, w1_ref, w2_ref, w3_ref, b_ref, o_ref, *,
               out_cols, sub_rows, precision):
    tb = o_ref.shape[0]          # batch-tile rows (static)
    h_p = w1_ref.shape[1]        # padded hidden width
    out_p = w3_ref.shape[1]      # padded output width (compute side)
    w_dtype = w1_ref.dtype

    b = b_ref[...].astype(jnp.float32)   # (3, l_p) packed biases
    b1 = b[0:1, :h_p]
    b2 = b[1:2, :h_p]
    b3 = b[2:3, :out_p]

    def mlp_rows(r, rows):
        # One sub-tile: everything stays in vregs (f32 MXU accumulation).
        x = x_ref[pl.ds(r, rows), :].astype(w_dtype)
        h1 = jnp.dot(x, w1_ref[...], preferred_element_type=jnp.float32,
                     precision=precision)
        h1 = jnp.maximum(h1 + b1, 0.0)
        h2 = jnp.dot(h1.astype(w_dtype), w2_ref[...],
                     preferred_element_type=jnp.float32, precision=precision)
        h2 = jnp.maximum(h2 + b2, 0.0)
        out = jnp.dot(h2.astype(w_dtype), w3_ref[...],
                      preferred_element_type=jnp.float32, precision=precision)
        out = out + b3
        # Narrow (out_cols-wide) store: 32x fewer HBM write bytes than a
        # 128-lane padded output for a 4-action DQN.
        o_ref[pl.ds(r, rows), :] = out[:, :out_cols].astype(o_ref.dtype)

    n_full, tail = divmod(tb, sub_rows)

    if n_full > 0:
        def body(s, carry):
            mlp_rows(pl.multiple_of(s * sub_rows, sub_rows), sub_rows)
            return carry
        jax.lax.fori_loop(0, n_full, body, 0, unroll=n_full <= 8)

    if tail:
        mlp_rows(n_full * sub_rows, tail)


def init_dqn_params(key, input_size, hidden_size, output_size):
    """PyTorch nn.Linear-style init (uniform +-1/sqrt(fan_in)); weights stored (in, out)."""
    ks = jax.random.split(key, 6)

    def linear_init(kw, kb, fan_in, fan_out):
        bound = 1.0 / jnp.sqrt(jnp.float32(fan_in))
        w = jax.random.uniform(kw, (fan_in, fan_out), jnp.float32, -bound, bound)
        b = jax.random.uniform(kb, (1, fan_out), jnp.float32, -bound, bound)
        return w, b

    w1, b1 = linear_init(ks[0], ks[1], input_size, hidden_size)
    w2, b2 = linear_init(ks[2], ks[3], hidden_size, hidden_size)
    w3, b3 = linear_init(ks[4], ks[5], output_size and hidden_size, output_size)
    return {"w1": w1, "b1": b1, "w2": w2, "b2": b2, "w3": w3, "b3": b3}


def pack_dqn_params(params, compute_dtype=jnp.float32):
    """Pad/pack parameters ONCE (hoisted out of the per-call forward).

    Weights become lane-padded (in, out) arrays in `compute_dtype` (use
    jnp.bfloat16 on v6e/v7x); the three biases are packed into one (3, l_p)
    f32 tile so they arrive with a single DMA.
    """
    w1, b1 = params["w1"], params["b1"]
    w2, b2 = params["w2"], params["b2"]
    w3, b3 = params["w3"], params["b3"]
    in_size, hidden = w1.shape
    out_size = w3.shape[1]

    h_p = _round_up(hidden, 128)
    out_p = _round_up(out_size, 128)
    l_p = max(h_p, out_p)

    return {
        # w1 keeps its native row count so it matches the unpadded x tile.
        "w1": _pad2d(w1, in_size, h_p).astype(compute_dtype),
        "w2": _pad2d(w2, h_p, h_p).astype(compute_dtype),
        "w3": _pad2d(w3, h_p, out_p).astype(compute_dtype),
        "b": jnp.concatenate(
            [_pad2d(b1, 1, l_p), _pad2d(b2, 1, l_p), _pad2d(b3, 1, l_p)],
            axis=0).astype(jnp.float32),
        "out_size": int(out_size),   # static metadata
    }


@functools.partial(jax.jit, static_argnames=("out_size", "tb"))
def _dqn_forward_jit(x, w1, w2, w3, b_packed, *, out_size, tb):
    B, in_size = x.shape
    assert w1.shape[0] == in_size
    h_p = w1.shape[1]
    out_p = w3.shape[1]
    l_p = b_packed.shape[1]

    # Batch tile: multiple of 8 sublanes, capped by `tb` and by ceil(B/2) so
    # that v7x's two TensorCores each get at least one tile ("parallel" axis).
    tb_eff = min(_round_up(tb, 8), _round_up(B, 8))
    half = _round_up((B + 1) // 2, 8)
    tb_eff = min(tb_eff, max(half, 8))
    b_pad = _round_up(B, tb_eff)
    grid = (b_pad // tb_eff,)

    # Only the batch dim is ever padded; feature dim stays native (no 8x
    # input-side HBM amplification).
    x_in = x if b_pad == B else jnp.pad(x, ((0, b_pad - B), (0, 0)))

    precision = (jax.lax.Precision.HIGHEST if w1.dtype == jnp.float32
                 else jax.lax.Precision.DEFAULT)

    # VMEM estimate: double-buffered x/out tiles + resident weights + biases
    # + sub-tile intermediates. Only raise the limit past v5e's 16 MiB scoped
    # default when actually needed.
    w_item = jnp.dtype(w1.dtype).itemsize
    sub = min(_SUB_ROWS, tb_eff)
    vmem_est = (2 * tb_eff * in_size * jnp.dtype(x.dtype).itemsize
                + 2 * tb_eff * out_size * 4
                + (in_size * h_p + h_p * h_p + h_p * out_p) * w_item
                + 3 * l_p * 4
                + 4 * sub * h_p * 4)
    vmem_limit = int(2 * vmem_est) if 2 * vmem_est > (16 << 20) else None

    kernel = functools.partial(dqn_kernel, out_cols=out_size,
                               sub_rows=_SUB_ROWS, precision=precision)

    out = pl.pallas_call(
        kernel,
        out_shape=jax.ShapeDtypeStruct((b_pad, out_size), jnp.float32),
        grid=grid,
        in_specs=[
            # x tiles stream over the batch grid (double-buffered by Pallas);
            # last block dim == full array dim (native in_size).
            pl.BlockSpec((tb_eff, in_size), lambda i: (i, 0)),
            # Weights / packed biases: constant index_map -> VMEM-resident.
            pl.BlockSpec((in_size, h_p), lambda i: (0, 0)),
            pl.BlockSpec((h_p, h_p), lambda i: (0, 0)),
            pl.BlockSpec((h_p, out_p), lambda i: (0, 0)),
            pl.BlockSpec((3, l_p), lambda i: (0, 0)),
        ],
        # Narrow (out_size-wide) output: no 32x write amplification, no
        # post-kernel column-slice pass.
        out_specs=pl.BlockSpec((tb_eff, out_size), lambda i: (i, 0)),
        compiler_params=pltpu.CompilerParams(
            dimension_semantics=("parallel",),   # shards batch tiles across TCs on v7x
            vmem_limit_bytes=vmem_limit,
        ),
    )(x_in, w1, w2, w3, b_packed)

    return out if b_pad == B else out[:B]


def dqn_forward(x, packed_params, *, tb=1024):
    """x: (B, input_size) f32; packed_params: output of pack_dqn_params."""
    return _dqn_forward_jit(x, packed_params["w1"], packed_params["w2"],
                            packed_params["w3"], packed_params["b"],
                            out_size=packed_params["out_size"], tb=tb)


if __name__ == "__main__":
    # Make the plain-JAX reference use exact f32 matmuls so the tolerance is real.
    jax.config.update("jax_default_matmul_precision", "highest")

    # Small DQN: state dim 16, hidden 32, 4 actions.
    input_size, hidden_size, output_size = 16, 32, 4
    batch = 8

    key = jax.random.PRNGKey(0)
    k_params, k_x, k_x2 = jax.random.split(key, 3)
    params = init_dqn_params(k_params, input_size, hidden_size, output_size)
    x = jax.random.normal(k_x, (batch, input_size), jnp.float32)

    def ref_fn(xx):
        h1 = jnp.maximum(xx @ params["w1"] + params["b1"], 0.0)
        h2 = jnp.maximum(h1 @ params["w2"] + params["b2"], 0.0)
        return h2 @ params["w3"] + params["b3"]

    # f32 path (precision=HIGHEST inside the kernel).
    packed_f32 = pack_dqn_params(params, compute_dtype=jnp.float32)
    out = jax.block_until_ready(dqn_forward(x, packed_f32))
    assert out.shape == (batch, output_size)
    assert jnp.allclose(out, ref_fn(x), atol=1e-5, rtol=1e-5)

    # bf16 weights/activations, f32 accumulation (v6e/v7x fast path).
    packed_bf16 = pack_dqn_params(params, compute_dtype=jnp.bfloat16)
    out_bf16 = jax.block_until_ready(dqn_forward(x, packed_bf16))
    assert out_bf16.shape == (batch, output_size)
    assert jnp.allclose(out_bf16, ref_fn(x), atol=5e-2, rtol=5e-2)

    # Moderate, non-tile-aligned batch: exercises the multi-tile grid, the
    # ceil(B/2) cap, the in-kernel sub-tile loop + tail, and the row pad/slice.
    batch2 = 600
    x2 = jax.random.normal(k_x2, (batch2, input_size), jnp.float32)
    out2 = jax.block_until_ready(dqn_forward(x2, packed_f32))
    assert out2.shape == (batch2, output_size)
    assert jnp.allclose(out2, ref_fn(x2), atol=1e-5, rtol=1e-5)

    print("KERNEL_OK")
</pallas_src>

<mosaic_0001>
module attributes {stable_mosaic.version = 11 : i64} {
  func.func @dqn_kernel(%arg0: i32, %arg1: memref<8x16xf32, #tpu.memory_space<vmem>>, %arg2: memref<16x128xf32, #tpu.memory_space<vmem>>, %arg3: memref<128x128xf32, #tpu.memory_space<vmem>>, %arg4: memref<128x128xf32, #tpu.memory_space<vmem>>, %arg5: memref<3x128xf32, #tpu.memory_space<vmem>>, %arg6: memref<8x4xf32, #tpu.memory_space<vmem>>) attributes {dimension_semantics = [#tpu.dimension_semantics<parallel>], iteration_bounds = array<i64: 1>, scalar_prefetch = 0 : i64, scratch_operands = 0 : i64, tpu.core_type = #tpu.core_type<tc>, window_params = [{transform_indices = @transform_0, window_bounds = array<i64: 8, 16>}, {pipeline_mode = #tpu.pipeline_mode<synchronous>, transform_indices = @transform_1, window_bounds = array<i64: 16, 128>}, {pipeline_mode = #tpu.pipeline_mode<synchronous>, transform_indices = @transform_2, window_bounds = array<i64: 128, 128>}, {pipeline_mode = #tpu.pipeline_mode<synchronous>, transform_indices = @transform_3, window_bounds = array<i64: 128, 128>}, {pipeline_mode = #tpu.pipeline_mode<synchronous>, transform_indices = @transform_4, window_bounds = array<i64: 3, 128>}, {transform_indices = @transform_5, window_bounds = array<i64: 8, 4>}]} {
    %c0 = arith.constant 0 : index
    %c0_0 = arith.constant 0 : index
    %0 = vector.load %arg5[%c0, %c0_0] : memref<3x128xf32, #tpu.memory_space<vmem>>, vector<3x128xf32>
    %1 = vector.extract_strided_slice %0 {offsets = [0, 0], sizes = [1, 128], strides = [1, 1]} : vector<3x128xf32> to vector<1x128xf32>
    %2 = vector.extract_strided_slice %0 {offsets = [1, 0], sizes = [1, 128], strides = [1, 1]} : vector<3x128xf32> to vector<1x128xf32>
    %3 = vector.extract_strided_slice %0 {offsets = [2, 0], sizes = [1, 128], strides = [1, 1]} : vector<3x128xf32> to vector<1x128xf32>
    %c0_1 = arith.constant 0 : index
    %c0_2 = arith.constant 0 : index
    %4 = vector.load %arg1[%c0_1, %c0_2] : memref<8x16xf32, #tpu.memory_space<vmem>>, vector<8x16xf32>
    %c0_3 = arith.constant 0 : index
    %c0_4 = arith.constant 0 : index
    %5 = vector.load %arg2[%c0_3, %c0_4] : memref<16x128xf32, #tpu.memory_space<vmem>>, vector<16x128xf32>
    %cst = arith.constant dense<0.000000e+00> : vector<8x128xf32>
    %6 = tpu.matmul %4, %5, %cst {dimension_numbers = #tpu.dot_dimension_numbers<[1], [0], [0], [1], [0, 0, 1, 1], [], []>, precision = #tpu.contract_precision<fp32>} : vector<8x16xf32>, vector<16x128xf32>, vector<8x128xf32> -> vector<8x128xf32>
    %7 = vector.broadcast %1 : vector<1x128xf32> to vector<8x128xf32>
    %8 = arith.addf %6, %7 : vector<8x128xf32>
    %cst_5 = arith.constant 0.000000e+00 : f32
    %9 = vector.broadcast %cst_5 : f32 to vector<8x128xf32>
    %10 = arith.maximumf %8, %9 : vector<8x128xf32>
    %c0_6 = arith.constant 0 : index
    %c0_7 = arith.constant 0 : index
    %11 = vector.load %arg3[%c0_6, %c0_7] : memref<128x128xf32, #tpu.memory_space<vmem>>, vector<128x128xf32>
    %cst_8 = arith.constant dense<0.000000e+00> : vector<8x128xf32>
    %12 = tpu.matmul %10, %11, %cst_8 {dimension_numbers = #tpu.dot_dimension_numbers<[1], [0], [0], [1], [0, 0, 1, 1], [], []>, precision = #tpu.contract_precision<fp32>} : vector<8x128xf32>, vector<128x128xf32>, vector<8x128xf32> -> vector<8x128xf32>
    %13 = vector.broadcast %2 : vector<1x128xf32> to vector<8x128xf32>
    %14 = arith.addf %12, %13 : vector<8x128xf32>
    %cst_9 = arith.constant 0.000000e+00 : f32
    %15 = vector.broadcast %cst_9 : f32 to vector<8x128xf32>
    %16 = arith.maximumf %14, %15 : vector<8x128xf32>
    %c0_10 = arith.constant 0 : index
    %c0_11 = arith.constant 0 : index
    %17 = vector.load %arg4[%c0_10, %c0_11] : memref<128x128xf32, #tpu.memory_space<vmem>>, vector<128x128xf32>
    %cst_12 = arith.constant dense<0.000000e+00> : vector<8x128xf32>
    %18 = tpu.matmul %16, %17, %cst_12 {dimension_numbers = #tpu.dot_dimension_numbers<[1], [0], [0], [1], [0, 0, 1, 1], [], []>, precision = #tpu.contract_precision<fp32>} : vector<8x128xf32>, vector<128x128xf32>, vector<8x128xf32> -> vector<8x128xf32>
    %19 = vector.broadcast %3 : vector<1x128xf32> to vector<8x128xf32>
    %20 = arith.addf %18, %19 : vector<8x128xf32>
    %21 = vector.extract_strided_slice %20 {offsets = [0, 0], sizes = [8, 4], strides = [1, 1]} : vector<8x128xf32> to vector<8x4xf32>
    %c0_13 = arith.constant 0 : index
    %c0_14 = arith.constant 0 : index
    %22 = vector.load %arg6[%c0_13, %c0_14] : memref<8x4xf32, #tpu.memory_space<vmem>>, vector<8x4xf32>
    tpu.vector_store %arg6[%c0_13, %c0_14], %21 {strides = array<i32>} : memref<8x4xf32, #tpu.memory_space<vmem>>, vector<8x4xf32>,
    return
  }
  func.func @transform_0(%arg0: i32) -> (i32, i32) {
    %c0_i32 = arith.constant 0 : i32
    %c0_i32_0 = arith.constant 0 : i32
    return %arg0, %c0_i32 : i32, i32
  }
  func.func @transform_1(%arg0: i32) -> (i32, i32) {
    %c0_i32 = arith.constant 0 : i32
    %c0_i32_0 = arith.constant 0 : i32
    %c0_i32_1 = arith.constant 0 : i32
    return %c0_i32, %c0_i32_0 : i32, i32
  }
  func.func @transform_2(%arg0: i32) -> (i32, i32) {
    %c0_i32 = arith.constant 0 : i32
    %c0_i32_0 = arith.constant 0 : i32
    %c0_i32_1 = arith.constant 0 : i32
    return %c0_i32, %c0_i32_0 : i32, i32
  }
  func.func @transform_3(%arg0: i32) -> (i32, i32) {
    %c0_i32 = arith.constant 0 : i32
    %c0_i32_0 = arith.constant 0 : i32
    %c0_i32_1 = arith.constant 0 : i32
    return %c0_i32, %c0_i32_0 : i32, i32
  }
  func.func @transform_4(%arg0: i32) -> (i32, i32) {
    %c0_i32 = arith.constant 0 : i32
    %c0_i32_0 = arith.constant 0 : i32
    %c0_i32_1 = arith.constant 0 : i32
    return %c0_i32, %c0_i32_0 : i32, i32
  }
  func.func @transform_5(%arg0: i32) -> (i32, i32) {
    %c0_i32 = arith.constant 0 : i32
    %c0_i32_0 = arith.constant 0 : i32
    return %arg0, %c0_i32 : i32, i32
  }
}

</mosaic_0001>

<llo_original>
// kernel: _dqn_forward_jit.1
$region0: #{_dqn_forward_jit.1}
  #allocation0 [shape = 'u32[]', space=smem, size = 0x4, offset = 0x4, fixed_abs, tag = 'smem constant byte address 0x4 - core index']
  #allocation1 [shape = 'u32[144,128]{1,0:T(1,128)}', space=vmem, size = 0x12000, scoped, tag = 'internal scratch']
  %s0 = inlined_call_operand.hbm [shape: f32[8,16], index: 0, kind: input, shape index: {}]
  %s1 = inlined_call_operand.hbm [shape: f32[16,128], index: 1, kind: input, shape index: {}]
  %s2 = inlined_call_operand.hbm [shape: f32[128,128], index: 2, kind: input, shape index: {}]
  %s3 = inlined_call_operand.hbm [shape: f32[128,128], index: 3, kind: input, shape index: {}]
  %s4 = inlined_call_operand.vmem [shape: f32[3,128], index: 4, kind: input, shape index: {}]
  %s5 = inlined_call_operand.vmem [shape: f32[8,4], index: 5, kind: output, shape index: {}]
  %s6 = sld [smem:[#allocation0]]
  $region46: #{_dqn_forward_jit.1} parent=0
    _
  %s8 = ssub.s32 1, %s6
  %s9 = scalar_select 0, %s8, %s6
  $region1: #{_dqn_forward_jit.1} parent=0
    #allocation2 [shape = 'u8[4096]{0}', space=vmem, size = 0x1000, scoped, tag = 'input window, operand 0, single buffered']
    #allocation3 [shape = 's32[1]{0}', space=sflag, size = 0x4, scoped, tag = 'scoped memory for _dqn_forward_jit.1']
    #allocation4 [shape = 'u8[8192]{0}', space=vmem, size = 0x2000, scoped, tag = 'input window, operand 1, single buffered']
    #allocation5 [shape = 's32[1]{0}', space=sflag, size = 0x4, scoped, tag = 'scoped memory for _dqn_forward_jit.1']
    #allocation6 [shape = 'u8[65536]{0}', space=vmem, size = 0x10000, scoped, tag = 'input window, operand 2, single buffered']
    #allocation7 [shape = 'u8[65536]{0}', space=vmem, size = 0x10000, scoped, tag = 'input window, operand 3, single buffered']
    #allocation8 [shape = 's32[1]{0}', space=sflag, size = 0x4, scoped, tag = 'scoped memory for _dqn_forward_jit.1']
    %10 = vsyncpa [#allocation3], 0
    %11 = vsyncpa [#allocation5], 0
    %12 = vsyncpa [#allocation8], 0
    // Predicated region
    $region2: #{_dqn_forward_jit.1} parent=1 // pred_check
      _
    $region3: #{_dqn_forward_jit.1} parent=1 // pred_check_branch
      %14 = sbr.rel (0) target = $region5
    $region4: #{_dqn_forward_jit.1} parent=1 // pred_region
      %s16 = ssub.s32 128, 128
      %17 = vsyncadd [#allocation3], %s16
      %s19 = sshll.u32 [#allocation2], 4
      %s20 = int_to_ptr.vmem [resolvable:$true] %s19
      %22 = dma.hbm_to_vmem [thread:$0]  %s0, 128, %s20, [#allocation3]
    $region5: #{_dqn_forward_jit.1} parent=1 // pred_fallthru
      _
    // Predicated region
    $region6: #{_dqn_forward_jit.1} parent=1 // pred_check
      _
    $region7: #{_dqn_forward_jit.1} parent=1 // pred_check_branch
      %24 = sbr.rel (0) target = $region9
    $region8: #{_dqn_forward_jit.1} parent=1 // pred_region
      %s26 = ssub.s32 256, 256
      %27 = vsyncadd [#allocation5], %s26
      %s28 = sshll.u32 [#allocation4], 4
      %s29 = int_to_ptr.vmem [resolvable:$true] %s28
      %34 = dma.hbm_to_vmem [thread:$0]  %s1, 256, %s29, [#allocation5], 128, 128, 8
    $region9: #{_dqn_forward_jit.1} parent=1 // pred_fallthru
      _
    // Predicated region
    $region10: #{_dqn_forward_jit.1} parent=1 // pred_check
      _
    $region11: #{_dqn_forward_jit.1} parent=1 // pred_check_branch
      %36 = sbr.rel (0) target = $region13
    $region12: #{_dqn_forward_jit.1} parent=1 // pred_region
      %s38 = ssub.s32 2048, 2048
      %39 = vsyncadd [#allocation5], %s38
      %s40 = sshll.u32 [#allocation6], 4
      %s41 = int_to_ptr.vmem [resolvable:$true] %s40
      %46 = dma.hbm_to_vmem [thread:$0]  %s2, 2048, %s41, [#allocation5], 128, 128, 8
    $region13: #{_dqn_forward_jit.1} parent=1 // pred_fallthru
      _
    // Predicated region
    $region14: #{_dqn_forward_jit.1} parent=1 // pred_check
      _
    $region15: #{_dqn_forward_jit.1} parent=1 // pred_check_branch
      %48 = sbr.rel (0) target = $region17
    $region16: #{_dqn_forward_jit.1} parent=1 // pred_region
      %s50 = ssub.s32 2048, 2048
      %51 = vsyncadd [#allocation8], %s50
      %s52 = sshll.u32 [#allocation7], 4
      %s53 = int_to_ptr.vmem [resolvable:$true] %s52
      %58 = dma.hbm_to_vmem [thread:$0]  %s3, 2048, %s53, [#allocation8], 128, 128, 8
    $region17: #{_dqn_forward_jit.1} parent=1 // pred_fallthru
      _
    // Predicated region
    $region18: #{_dqn_forward_jit.1} parent=1 // pred_check
      _
    $region19: #{_dqn_forward_jit.1} parent=1 // pred_check_branch
      %60 = sbr.rel (0) target = $region21
    $region20: #{_dqn_forward_jit.1} parent=1 // pred_region
      _
    $region21: #{_dqn_forward_jit.1} parent=1 // pred_fallthru
      _
    // Predicated region
    $region22: #{_dqn_forward_jit.1} parent=1 // pred_check
      _
    $region23: #{_dqn_forward_jit.1} parent=1 // pred_check_branch
      %62 = sbr.rel (0) target = $region25
    $region24: #{_dqn_forward_jit.1} parent=1 // pred_region
      %63 = dma.done [#allocation3], 128
    $region25: #{_dqn_forward_jit.1} parent=1 // pred_fallthru
      _
    // Predicated region
    $region26: #{_dqn_forward_jit.1} parent=1 // pred_check
      _
    $region27: #{_dqn_forward_jit.1} parent=1 // pred_check_branch
      %65 = sbr.rel (0) target = $region29
    $region28: #{_dqn_forward_jit.1} parent=1 // pred_region
      %66 = dma.done [#allocation5], 256
    $region29: #{_dqn_forward_jit.1} parent=1 // pred_fallthru
      _
    // Predicated region
    $region30: #{_dqn_forward_jit.1} parent=1 // pred_check
      _
    $region31: #{_dqn_forward_jit.1} parent=1 // pred_check_branch
      %68 = sbr.rel (0) target = $region33
    $region32: #{_dqn_forward_jit.1} parent=1 // pred_region
      %69 = dma.done [#allocation5], 2048
    $region33: #{_dqn_forward_jit.1} parent=1 // pred_fallthru
      _
    // Predicated region
    $region34: #{_dqn_forward_jit.1} parent=1 // pred_check
      _
    $region35: #{_dqn_forward_jit.1} parent=1 // pred_check_branch
      %71 = sbr.rel (0) target = $region37
    $region36: #{_dqn_forward_jit.1} parent=1 // pred_region
      %72 = dma.done [#allocation8], 2048
    $region37: #{_dqn_forward_jit.1} parent=1 // pred_fallthru
      _
    %v73 = vld [vmem:[%s4] sm:$0x7]
    %v74 = vld [vmem:[#allocation2] sm:$0xff]
    %v75 = vld [vmem:[#allocation4] sm:$0xff]
    %v76 = vld [vmem:[#allocation4 + $0x8] sm:$0xff]
    %v77 = vlaneseq
    %v78 = vshrl.u32 %v77, 7
    %v79 = vsub.s32 0, %v78
    %v80 = vrot.slane %v73, %v79
    %vm81 = vcmask 130048
    %v83 = vsel %vm81, %v74, 0
    %85 = vmatprep.subr.mxu0 0.0
    %v86 = vand.u32 %v75, 4294901760
    %87 = vmatpush1.msra.mxu0 %v86
    %88 = vmatprep.subr.mxu0 0.0
    %v89 = vand.u32 %v76, 4294901760
    %90 = vmatpush1.msra.mxu0 %v89
    %91 = vmatprep.subr.mxu0 0.0
    %92 = vmatpush1.msra.mxu0 0.0
    %93 = vmatprep.subr.mxu0 0.0
    %94 = vmatpush1.msra.mxu0 0.0
    %95 = vmatprep.subr.mxu0 0.0
    %96 = vmatpush1.msra.mxu0 0.0
    %97 = vmatprep.subr.mxu0 0.0
    %98 = vmatpush1.msra.mxu0 0.0
    %99 = vmatprep.subr.mxu0 0.0
    %100 = vmatpush1.msra.mxu0 0.0
    %101 = vmatprep.subr.mxu0 0.0
    %102 = vmatpush1.msra.mxu0 0.0
    %103 = vmatprep.subr.mxu0 0.0
    %104 = vmatpush1.msra.mxu0 0.0
    %105 = vmatprep.subr.mxu0 0.0
    %106 = vmatpush1.msra.mxu0 0.0
    %107 = vmatprep.subr.mxu0 0.0
    %108 = vmatpush1.msra.mxu0 0.0
    %109 = vmatprep.subr.mxu0 0.0
    %110 = vmatpush1.msra.mxu0 0.0
    %111 = vmatprep.subr.mxu0 0.0
    %112 = vmatpush1.msra.mxu0 0.0
    %113 = vmatprep.subr.mxu0 0.0
    %114 = vmatpush1.msra.mxu0 0.0
    %115 = vmatprep.subr.mxu0 0.0
    %116 = vmatpush1.msra.mxu0 0.0
    %117 = vmatprep.subr.mxu0 0.0
    %118 = vmatpush1.msra.mxu0 0.0
    %119 = vmatprep.subr.mxu0 0.0
    %120 = vmatpush1.msra.mxu0 0.0
    %121 = vmatprep.subr.mxu0 0.0
    %122 = vmatpush1.msra.mxu0 0.0
    %123 = vmatprep.subr.mxu0 0.0
    %124 = vmatpush1.msra.mxu0 0.0
    %125 = vmatprep.subr.mxu0 0.0
    %126 = vmatpush1.msra.mxu0 0.0
    %127 = vmatprep.subr.mxu0 0.0
    %128 = vmatpush1.msra.mxu0 0.0
    %129 = vmatprep.subr.mxu0 0.0
    %130 = vmatpush1.msra.mxu0 0.0
    %131 = vmatprep.subr.mxu0 0.0
    %132 = vmatpush1.msra.mxu0 0.0
    %133 = vmatprep.subr.mxu0 0.0
    %134 = vmatpush1.msra.mxu0 0.0
    %135 = vmatprep.subr.mxu0 0.0
    %136 = vmatpush1.msra.mxu0 0.0
    %137 = vmatprep.subr.mxu0 0.0
    %138 = vmatpush1.msra.mxu0 0.0
    %139 = vmatprep.subr.mxu0 0.0
    %140 = vmatpush1.msra.mxu0 0.0
    %141 = vmatprep.subr.mxu0 0.0
    %142 = vmatpush1.msra.mxu0 0.0
    %143 = vmatprep.subr.mxu0 0.0
    %144 = vmatpush1.msra.mxu0 0.0
    %145 = vmatprep.subr.mxu0 0.0
    %146 = vmatpush1.msra.mxu0 0.0
    %147 = vmatprep.subr.mxu0 0.0
    %148 = vmatpush1.msra.mxu0 0.0
    %149 = vmatprep.subr.mxu0 0.0
    %150 = vmatpush1.msra.mxu0 0.0
    %151 = vmatprep.mubr.f32.mxu0 0.0
    %v152 = vand.u32 %v83, 4294901760
    %v153 = vsub.f32 %v83, %v152
    %v154 = vand.u32 %v153, 4294901760
    %v155 = vsub.f32 %v153, %v154
    %v156 = vand.u32 %v155, 4294901760
    %157 = vmatmul.mubr.f32.gmra.mrb[0].mxu0 %v156
    %v158 = vpop.f32.mrb[0].mxu0
    %v159 = vadd.f32 %v80, %v158
    %v160 = vpop.f32.mrb[0].mxu0
    %161 = vdwg.mxu0
    %162 = vmatprep.subr.mxu0 0.0
    %v163 = vand.u32 %v75, 4294901760
    %v164 = vsub.f32 %v75, %v163
    %v165 = vand.u32 %v164, 4294901760
    %v166 = vsub.f32 %v164, %v165
    %v167 = vand.u32 %v166, 4294901760
    %168 = vmatpush1.msra.mxu0 %v167
    %169 = vmatprep.subr.mxu0 0.0
    %v170 = vand.u32 %v76, 4294901760
    %v171 = vsub.f32 %v76, %v170
    %v172 = vand.u32 %v171, 4294901760
    %v173 = vsub.f32 %v171, %v172
    %v174 = vand.u32 %v173, 4294901760
    %175 = vmatpush1.msra.mxu0 %v174
    %176 = vmatprep.subr.mxu0 0.0
    %177 = vmatpush1.msra.mxu0 0.0
    %178 = vmatprep.subr.mxu0 0.0
    %179 = vmatpush1.msra.mxu0 0.0
    %180 = vmatprep.subr.mxu0 0.0
    %181 = vmatpush1.msra.mxu0 0.0
    %182 = vmatprep.subr.mxu0 0.0
    %183 = vmatpush1.msra.mxu0 0.0
    %184 = vmatprep.subr.mxu0 0.0
    %185 = vmatpush1.msra.mxu0 0.0
    %186 = vmatprep.subr.mxu0 0.0
    %187 = vmatpush1.msra.mxu0 0.0
    %188 = vmatprep.subr.mxu0 0.0
    %189 = vmatpush1.msra.mxu0 0.0
    %190 = vmatprep.subr.mxu0 0.0
    %191 = vmatpush1.msra.mxu0 0.0
    %192 = vmatprep.subr.mxu0 0.0
    %193 = vmatpush1.msra.mxu0 0.0
    %194 = vmatprep.subr.mxu0 0.0
    %195 = vmatpush1.msra.mxu0 0.0
    %196 = vmatprep.subr.mxu0 0.0
    %197 = vmatpush1.msra.mxu0 0.0
    %198 = vmatprep.subr.mxu0 0.0
    %199 = vmatpush1.msra.mxu0 0.0
    %200 = vmatprep.subr.mxu0 0.0
    %201 = vmatpush1.msra.mxu0 0.0
    %202 = vmatprep.subr.mxu0 0.0
    %203 = vmatpush1.msra.mxu0 0.0
    %204 = vmatprep.subr.mxu0 0.0
    %205 = vmatpush1.msra.mxu0 0.0
    %206 = vmatprep.subr.mxu0 0.0
    %207 = vmatpush1.msra.mxu0 0.0
    %208 = vmatprep.subr.mxu0 0.0
    %209 = vmatpush1.msra.mxu0 0.0
    %210 = vmatprep.subr.mxu0 0.0
    %211 = vmatpush1.msra.mxu0 0.0
    %212 = vmatprep.subr.mxu0 0.0
    %213 = vmatpush1.msra.mxu0 0.0
    %214 = vmatprep.subr.mxu0 0.0
    %215 = vmatpush1.msra.mxu0 0.0
    %216 = vmatprep.subr.mxu0 0.0
    %217 = vmatpush1.msra.mxu0 0.0
    %218 = vmatprep.subr.mxu0 0.0
    %219 = vmatpush1.msra.mxu0 0.0
    %220 = vmatprep.subr.mxu0 0.0
    %221 = vmatpush1.msra.mxu0 0.0
    %222 = vmatprep.subr.mxu0 0.0
    %223 = vmatpush1.msra.mxu0 0.0
    %224 = vmatprep.subr.mxu0 0.0
    %225 = vmatpush1.msra.mxu0 0.0
    %226 = vmatprep.subr.mxu0 0.0
    %227 = vmatpush1.msra.mxu0 0.0
    %228 = vmatprep.subr.mxu0 0.0
    %229 = vmatpush1.msra.mxu0 0.0
    %230 = vmatprep.subr.mxu0 0.0
    %231 = vmatpush1.msra.mxu0 0.0
    %232 = vmatprep.subr.mxu0 0.0
    %233 = vmatpush1.msra.mxu0 0.0
    %234 = vmatprep.subr.mxu0 0.0
    %235 = vmatpush1.msra.mxu0 0.0
    %236 = vmatprep.mubr.f32.mxu0 0.0
    %v237 = vand.u32 %v83, 4294901760
    %238 = vmatmul.mubr.f32.gmra.mrb[0].mxu0 %v237
    %v239 = vpop.f32.mrb[0].mxu0
    %v240 = vadd.f32 %v159, %v239
    %v241 = vpop.f32.mrb[0].mxu0
    %242 = vdwg.mxu0
    %243 = vmatprep.subr.mxu0 0.0
    %v244 = vand.u32 %v75, 4294901760
    %v245 = vsub.f32 %v75, %v244
    %246 = vmatpush1.msra.mxu0 %v245
    %247 = vmatprep.subr.mxu0 0.0
    %v248 = vand.u32 %v76, 4294901760
    %v249 = vsub.f32 %v76, %v248
    %250 = vmatpush1.msra.mxu0 %v249
    %251 = vmatprep.subr.mxu0 0.0
    %252 = vmatpush1.msra.mxu0 0.0
    %253 = vmatprep.subr.mxu0 0.0
    %254 = vmatpush1.msra.mxu0 0.0
    %255 = vmatprep.subr.mxu0 0.0
    %256 = vmatpush1.msra.mxu0 0.0
    %257 = vmatprep.subr.mxu0 0.0
    %258 = vmatpush1.msra.mxu0 0.0
    %259 = vmatprep.subr.mxu0 0.0
    %260 = vmatpush1.msra.mxu0 0.0
    %261 = vmatprep.subr.mxu0 0.0
    %262 = vmatpush1.msra.mxu0 0.0
    %263 = vmatprep.subr.mxu0 0.0
    %264 = vmatpush1.msra.mxu0 0.0
    %265 = vmatprep.subr.mxu0 0.0
    %266 = vmatpush1.msra.mxu0 0.0
    %267 = vmatprep.subr.mxu0 0.0
    %268 = vmatpush1.msra.mxu0 0.0
    %269 = vmatprep.subr.mxu0 0.0
    %270 = vmatpush1.msra.mxu0 0.0
    %271 = vmatprep.subr.mxu0 0.0
    %272 = vmatpush1.msra.mxu0 0.0
    %273 = vmatprep.subr.mxu0 0.0
    %274 = vmatpush1.msra.mxu0 0.0
    %275 = vmatprep.subr.mxu0 0.0
    %276 = vmatpush1.msra.mxu0 0.0
    %277 = vmatprep.subr.mxu0 0.0
    %278 = vmatpush1.msra.mxu0 0.0
    %279 = vmatprep.subr.mxu0 0.0
    %280 = vmatpush1.msra.mxu0 0.0
    %281 = vmatprep.subr.mxu0 0.0
    %282 = vmatpush1.msra.mxu0 0.0
    %283 = vmatprep.subr.mxu0 0.0
    %284 = vmatpush1.msra.mxu0 0.0
    %285 = vmatprep.subr.mxu0 0.0
    %286 = vmatpush1.msra.mxu0 0.0
    %287 = vmatprep.subr.mxu0 0.0
    %288 = vmatpush1.msra.mxu0 0.0
    %289 = vmatprep.subr.mxu0 0.0
    %290 = vmatpush1.msra.mxu0 0.0
    %291 = vmatprep.subr.mxu0 0.0
    %292 = vmatpush1.msra.mxu0 0.0
    %293 = vmatprep.subr.mxu0 0.0
    %294 = vmatpush1.msra.mxu0 0.0
    %295 = vmatprep.subr.mxu0 0.0
    %296 = vmatpush1.msra.mxu0 0.0
    %297 = vmatprep.subr.mxu0 0.0
    %298 = vmatpush1.msra.mxu0 0.0
    %299 = vmatprep.subr.mxu0 0.0
    %300 = vmatpush1.msra.mxu0 0.0
    %301 = vmatprep.subr.mxu0 0.0
    %302 = vmatpush1.msra.mxu0 0.0
    %303 = vmatprep.subr.mxu0 0.0
    %304 = vmatpush1.msra.mxu0 0.0
    %305 = vmatprep.subr.mxu0 0.0
    %306 = vmatpush1.msra.mxu0 0.0
    %307 = vmatprep.subr.mxu0 0.0
    %308 = vmatpush1.msra.mxu0 0.0
    %309 = vmatprep.subr.mxu0 0.0
    %310 = vmatpush1.msra.mxu0 0.0
    %311 = vmatprep.mubr.f32.mxu0 0.0
    %v312 = vand.u32 %v83, 4294901760
    %v313 = vsub.f32 %v83, %v312
    %314 = vmatmul.mubr.f32.gmra.mrb[0].mxu0 %v313
    %v315 = vpop.f32.mrb[0].mxu0
    %v316 = vadd.f32 %v240, %v315
    %v317 = vpop.f32.mrb[0].mxu0
    %318 = vdwg.mxu0
    %319 = vmatprep.subr.mxu0 0.0
    %v320 = vand.u32 %v75, 4294901760
    %321 = vmatpush1.msra.mxu0 %v320
    %322 = vmatprep.subr.mxu0 0.0
    %v323 = vand.u32 %v76, 4294901760
    %324 = vmatpush1.msra.mxu0 %v323
    %325 = vmatprep.subr.mxu0 0.0
    %326 = vmatpush1.msra.mxu0 0.0
    %327 = vmatprep.subr.mxu0 0.0
    %328 = vmatpush1.msra.mxu0 0.0
    %329 = vmatprep.subr.mxu0 0.0
    %330 = vmatpush1.msra.mxu0 0.0
    %331 = vmatprep.subr.mxu0 0.0
    %332 = vmatpush1.msra.mxu0 0.0
    %333 = vmatprep.subr.mxu0 0.0
    %334 = vmatpush1.msra.mxu0 0.0
    %335 = vmatprep.subr.mxu0 0.0
    %336 = vmatpush1.msra.mxu0 0.0
    %337 = vmatprep.subr.mxu0 0.0
    %338 = vmatpush1.msra.mxu0 0.0
    %339 = vmatprep.subr.mxu0 0.0
    %340 = vmatpush1.msra.mxu0 0.0
    %341 = vmatprep.subr.mxu0 0.0
    %342 = vmatpush1.msra.mxu0 0.0
    %343 = vmatprep.subr.mxu0 0.0
    %344 = vmatpush1.msra.mxu0 0.0
    %345 = vmatprep.subr.mxu0 0.0
    %346 = vmatpush1.msra.mxu0 0.0
    %347 = vmatprep.subr.mxu0 0.0
    %348 = vmatpush1.msra.mxu0 0.0
    %349 = vmatprep.subr.mxu0 0.0
    %350 = vmatpush1.msra.mxu0 0.0
    %351 = vmatprep.subr.mxu0 0.0
    %352 = vmatpush1.msra.mxu0 0.0
    %353 = vmatprep.subr.mxu0 0.0
    %354 = vmatpush1.msra.mxu0 0.0
    %355 = vmatprep.subr.mxu0 0.0
    %356 = vmatpush1.msra.mxu0 0.0
    %357 = vmatprep.subr.mxu0 0.0
    %358 = vmatpush1.msra.mxu0 0.0
    %359 = vmatprep.subr.mxu0 0.0
    %360 = vmatpush1.msra.mxu0 0.0
    %361 = vmatprep.subr.mxu0 0.0
    %362 = vmatpush1.msra.mxu0 0.0
    %363 = vmatprep.subr.mxu0 0.0
    %364 = vmatpush1.msra.mxu0 0.0
    %365 = vmatprep.subr.mxu0 0.0
    %366 = vmatpush1.msra.mxu0 0.0
    %367 = vmatprep.subr.mxu0 0.0
    %368 = vmatpush1.msra.mxu0 0.0
    %369 = vmatprep.subr.mxu0 0.0
    %370 = vmatpush1.msra.mxu0 0.0
    %371 = vmatprep.subr.mxu0 0.0
    %372 = vmatpush1.msra.mxu0 0.0
    %373 = vmatprep.subr.mxu0 0.0
    %374 = vmatpush1.msra.mxu0 0.0
    %375 = vmatprep.subr.mxu0 0.0
    %376 = vmatpush1.msra.mxu0 0.0
    %377 = vmatprep.subr.mxu0 0.0
    %378 = vmatpush1.msra.mxu0 0.0
    %379 = vmatprep.subr.mxu0 0.0
    %380 = vmatpush1.msra.mxu0 0.0
    %381 = vmatprep.subr.mxu0 0.0
    %382 = vmatpush1.msra.mxu0 0.0
    %383 = vmatprep.subr.mxu0 0.0
    %384 = vmatpush1.msra.mxu0 0.0
    %385 = vmatprep.mubr.f32.mxu0 0.0
    %v386 = vand.u32 %v83, 4294901760
    %v387 = vsub.f32 %v83, %v386
    %v388 = vand.u32 %v387, 4294901760
    %389 = vmatmul.mubr.f32.gmra.mrb[0].mxu0 %v388
    %v390 = vpop.f32.mrb[0].mxu0
    %v391 = vadd.f32 %v316, %v390
    %v392 = vpop.f32.mrb[0].mxu0
    %393 = vdwg.mxu0
    %394 = vmatprep.subr.mxu0 0.0
    %v395 = vand.u32 %v75, 4294901760
    %v396 = vsub.f32 %v75, %v395
    %v397 = vand.u32 %v396, 4294901760
    %398 = vmatpush1.msra.mxu0 %v397
    %399 = vmatprep.subr.mxu0 0.0
    %v400 = vand.u32 %v76, 4294901760
    %v401 = vsub.f32 %v76, %v400
    %v402 = vand.u32 %v401, 4294901760
    %403 = vmatpush1.msra.mxu0 %v402
    %404 = vmatprep.subr.mxu0 0.0
    %405 = vmatpush1.msra.mxu0 0.0
    %406 = vmatprep.subr.mxu0 0.0
    %407 = vmatpush1.msra.mxu0 0.0
    %408 = vmatprep.subr.mxu0 0.0
    %409 = vmatpush1.msra.mxu0 0.0
    %410 = vmatprep.subr.mxu0 0.0
    %411 = vmatpush1.msra.mxu0 0.0
    %412 = vmatprep.subr.mxu0 0.0
    %413 = vmatpush1.msra.mxu0 0.0
    %414 = vmatprep.subr.mxu0 0.0
    %415 = vmatpush1.msra.mxu0 0.0
    %416 = vmatprep.subr.mxu0 0.0
    %417 = vmatpush1.msra.mxu0 0.0
    %418 = vmatprep.subr.mxu0 0.0
    %419 = vmatpush1.msra.mxu0 0.0
    %420 = vmatprep.subr.mxu0 0.0
    %421 = vmatpush1.msra.mxu0 0.0
    %422 = vmatprep.subr.mxu0 0.0
    %423 = vmatpush1.msra.mxu0 0.0
    %424 = vmatprep.subr.mxu0 0.0
    %425 = vmatpush1.msra.mxu0 0.0
    %426 = vmatprep.subr.mxu0 0.0
    %427 = vmatpush1.msra.mxu0 0.0
    %428 = vmatprep.subr.mxu0 0.0
    %429 = vmatpush1.msra.mxu0 0.0
    %430 = vmatprep.subr.mxu0 0.0
    %431 = vmatpush1.msra.mxu0 0.0
    %432 = vmatprep.subr.mxu0 0.0
    %433 = vmatpush1.msra.mxu0 0.0
    %434 = vmatprep.subr.mxu0 0.0
    %435 = vmatpush1.msra.mxu0 0.0
    %436 = vmatprep.subr.mxu0 0.0
    %437 = vmatpush1.msra.mxu0 0.0
    %438 = vmatprep.subr.mxu0 0.0
    %439 = vmatpush1.msra.mxu0 0.0
    %440 = vmatprep.subr.mxu0 0.0
    %441 = vmatpush1.msra.mxu0 0.0
    %442 = vmatprep.subr.mxu0 0.0
    %443 = vmatpush1.msra.mxu0 0.0
    %444 = vmatprep.subr.mxu0 0.0
    %445 = vmatpush1.msra.mxu0 0.0
    %446 = vmatprep.subr.mxu0 0.0
    %447 = vmatpush1.msra.mxu0 0.0
    %448 = vmatprep.subr.mxu0 0.0
    %449 = vmatpush1.msra.mxu0 0.0
    %450 = vmatprep.subr.mxu0 0.0
    %451 = vmatpush1.msra.mxu0 0.0
    %452 = vmatprep.subr.mxu0 0.0
    %453 = vmatpush1.msra.mxu0 0.0
    %454 = vmatprep.subr.mxu0 0.0
    %455 = vmatpush1.msra.mxu0 0.0
    %456 = vmatprep.subr.mxu0 0.0
    %457 = vmatpush1.msra.mxu0 0.0
    %458 = vmatprep.subr.mxu0 0.0
    %459 = vmatpush1.msra.mxu0 0.0
    %460 = vmatprep.subr.mxu0 0.0
    %461 = vmatpush1.msra.mxu0 0.0
    %462 = vmatprep.subr.mxu0 0.0
    %463 = vmatpush1.msra.mxu0 0.0
    %464 = vmatprep.mubr.f32.mxu0 0.0
    %v465 = vand.u32 %v83, 4294901760
    %466 = vmatmul.mubr.f32.gmra.mrb[0].mxu0 %v465
    %v467 = vpop.f32.mrb[0].mxu0
    %v468 = vadd.f32 %v391, %v467
    %v469 = vpop.f32.mrb[0].mxu0
    %470 = vdwg.mxu0
    %471 = vmatprep.subr.mxu0 0.0
    %v472 = vand.u32 %v75, 4294901760
    %473 = vmatpush1.msra.mxu0 %v472
    %474 = vmatprep.subr.mxu0 0.0
    %v475 = vand.u32 %v76, 4294901760
    %476 = vmatpush1.msra.mxu0 %v475
    %477 = vmatprep.subr.mxu0 0.0
    %478 = vmatpush1.msra.mxu0 0.0
    %479 = vmatprep.subr.mxu0 0.0
    %480 = vmatpush1.msra.mxu0 0.0
    %481 = vmatprep.subr.mxu0 0.0
    %482 = vmatpush1.msra.mxu0 0.0
    %483 = vmatprep.subr.mxu0 0.0
    %484 = vmatpush1.msra.mxu0 0.0
    %485 = vmatprep.subr.mxu0 0.0
    %486 = vmatpush1.msra.mxu0 0.0
    %487 = vmatprep.subr.mxu0 0.0
    %488 = vmatpush1.msra.mxu0 0.0
    %489 = vmatprep.subr.mxu0 0.0
    %490 = vmatpush1.msra.mxu0 0.0
    %491 = vmatprep.subr.mxu0 0.0
    %492 = vmatpush1.msra.mxu0 0.0
    %493 = vmatprep.subr.mxu0 0.0
    %494 = vmatpush1.msra.mxu0 0.0
    %495 = vmatprep.subr.mxu0 0.0
    %496 = vmatpush1.msra.mxu0 0.0
    %497 = vmatprep.subr.mxu0 0.0
    %498 = vmatpush1.msra.mxu0 0.0
    %499 = vmatprep.subr.mxu0 0.0
    %500 = vmatpush1.msra.mxu0 0.0
    %501 = vmatprep.subr.mxu0 0.0
    %502 = vmatpush1.msra.mxu0 0.0
    %503 = vmatprep.subr.mxu0 0.0
    %504 = vmatpush1.msra.mxu0 0.0
    %505 = vmatprep.subr.mxu0 0.0
    %506 = vmatpush1.msra.mxu0 0.0
    %507 = vmatprep.subr.mxu0 0.0
    %508 = vmatpush1.msra.mxu0 0.0
    %509 = vmatprep.subr.mxu0 0.0
    %510 = vmatpush1.msra.mxu0 0.0
    %511 = vmatprep.subr.mxu0 0.0
    %512 = vmatpush1.msra.mxu0 0.0
    %513 = vmatprep.subr.mxu0 0.0
    %514 = vmatpush1.msra.mxu0 0.0
    %515 = vmatprep.subr.mxu0 0.0
    %516 = vmatpush1.msra.mxu0 0.0
    %517 = vmatprep.subr.mxu0 0.0
    %518 = vmatpush1.msra.mxu0 0.0
    %519 = vmatprep.subr.mxu0 0.0
    %520 = vmatpush1.msra.mxu0 0.0
    %521 = vmatprep.subr.mxu0 0.0
    %522 = vmatpush1.msra.mxu0 0.0
    %523 = vmatprep.subr.mxu0 0.0
    %524 = vmatpush1.msra.mxu0 0.0
    %525 = vmatprep.subr.mxu0 0.0
    %526 = vmatpush1.msra.mxu0 0.0
    %527 = vmatprep.subr.mxu0 0.0
    %528 = vmatpush1.msra.mxu0 0.0
    %529 = vmatprep.subr.mxu0 0.0
    %530 = vmatpush1.msra.mxu0 0.0
    %531 = vmatprep.subr.mxu0 0.0
    %532 = vmatpush1.msra.mxu0 0.0
    %533 = vmatprep.subr.mxu0 0.0
    %534 = vmatpush1.msra.mxu0 0.0
    %535 = vmatprep.subr.mxu0 0.0
    %536 = vmatpush1.msra.mxu0 0.0
    %537 = vmatprep.mubr.f32.mxu0 0.0
    %v538 = vand.u32 %v83, 4294901760
    %539 = vmatmul.mubr.f32.gmra.mrb[0].mxu0 %v538
    %v540 = vpop.f32.mrb[0].mxu0
    %v541 = vadd.f32 %v468, %v540
    %v542 = vpop.f32.mrb[0].mxu0
    %543 = vdwg.mxu0
    %v544 = vmax.f32 %v541, 0.0
    %v545 = vld [vmem:[#allocation6] sm:$0xff]
    %v546 = vld [vmem:[#allocation6 + $0x8] sm:$0xff]
    %v547 = vld [vmem:[#allocation6 + $0x10] sm:$0xff]
    %v548 = vld [vmem:[#allocation6 + $0x18] sm:$0xff]
    %v549 = vld [vmem:[#allocation6 + $0x20] sm:$0xff]
    %v550 = vld [vmem:[#allocation6 + $0x28] sm:$0xff]
    %v551 = vld [vmem:[#allocation6 + $0x30] sm:$0xff]
    %v552 = vld [vmem:[#allocation6 + $0x38] sm:$0xff]
    %v553 = vld [vmem:[#allocation6 + $0x40] sm:$0xff]
    %v554 = vld [vmem:[#allocation6 + $0x48] sm:$0xff]
    %v555 = vld [vmem:[#allocation6 + $0x50] sm:$0xff]
    %v556 = vld [vmem:[#allocation6 + $0x58] sm:$0xff]
    %v557 = vld [vmem:[#allocation6 + $0x60] sm:$0xff]
    %v558 = vld [vmem:[#allocation6 + $0x68] sm:$0xff]
    %v559 = vld [vmem:[#allocation6 + $0x70] sm:$0xff]
    %v560 = vld [vmem:[#allocation6 + $0x78] sm:$0xff]
    %v561 = vlaneseq
    %v562 = vshrl.u32 %v561, 7
    %v563 = vsub.s32 1, %v562
    %v564 = vrot.slane %v73, %v563
    %565 = vmatprep.subr.mxu0 0.0
    %v566 = vand.u32 %v545, 4294901760
    %567 = vmatpush1.msra.mxu0 %v566
    %568 = vmatprep.subr.mxu0 0.0
    %v569 = vand.u32 %v546, 4294901760
    %570 = vmatpush1.msra.mxu0 %v569
    %571 = vmatprep.subr.mxu0 0.0
    %v572 = vand.u32 %v547, 4294901760
    %573 = vmatpush1.msra.mxu0 %v572
    %574 = vmatprep.subr.mxu0 0.0
    %v575 = vand.u32 %v548, 4294901760
    %576 = vmatpush1.msra.mxu0 %v575
    %577 = vmatprep.subr.mxu0 0.0
    %v578 = vand.u32 %v549, 4294901760
    %579 = vmatpush1.msra.mxu0 %v578
    %580 = vmatprep.subr.mxu0 0.0
    %v581 = vand.u32 %v550, 4294901760
    %582 = vmatpush1.msra.mxu0 %v581
    %583 = vmatprep.subr.mxu0 0.0
    %v584 = vand.u32 %v551, 4294901760
    %585 = vmatpush1.msra.mxu0 %v584
    %586 = vmatprep.subr.mxu0 0.0
    %v587 = vand.u32 %v552, 4294901760
    %588 = vmatpush1.msra.mxu0 %v587
    %589 = vmatprep.subr.mxu0 0.0
    %v590 = vand.u32 %v553, 4294901760
    %591 = vmatpush1.msra.mxu0 %v590
    %592 = vmatprep.subr.mxu0 0.0
    %v593 = vand.u32 %v554, 4294901760
    %594 = vmatpush1.msra.mxu0 %v593
    %595 = vmatprep.subr.mxu0 0.0
    %v596 = vand.u32 %v555, 4294901760
    %597 = vmatpush1.msra.mxu0 %v596
    %598 = vmatprep.subr.mxu0 0.0
    %v599 = vand.u32 %v556, 4294901760
    %600 = vmatpush1.msra.mxu0 %v599
    %601 = vmatprep.subr.mxu0 0.0
    %v602 = vand.u32 %v557, 4294901760
    %603 = vmatpush1.msra.mxu0 %v602
    %604 = vmatprep.subr.mxu0 0.0
    %v605 = vand.u32 %v558, 4294901760
    %606 = vmatpush1.msra.mxu0 %v605
    %607 = vmatprep.subr.mxu0 0.0
    %v608 = vand.u32 %v559, 4294901760
    %609 = vmatpush1.msra.mxu0 %v608
    %610 = vmatprep.subr.mxu0 0.0
    %v611 = vand.u32 %v560, 4294901760
    %612 = vmatpush1.msra.mxu0 %v611
    %613 = vmatprep.subr.mxu0 0.0
    %614 = vmatpush1.msra.mxu0 0.0
    %615 = vmatprep.subr.mxu0 0.0
    %616 = vmatpush1.msra.mxu0 0.0
    %617 = vmatprep.subr.mxu0 0.0
    %618 = vmatpush1.msra.mxu0 0.0
    %619 = vmatprep.subr.mxu0 0.0
    %620 = vmatpush1.msra.mxu0 0.0
    %621 = vmatprep.subr.mxu0 0.0
    %622 = vmatpush1.msra.mxu0 0.0
    %623 = vmatprep.subr.mxu0 0.0
    %624 = vmatpush1.msra.mxu0 0.0
    %625 = vmatprep.subr.mxu0 0.0
    %626 = vmatpush1.msra.mxu0 0.0
    %627 = vmatprep.subr.mxu0 0.0
    %628 = vmatpush1.msra.mxu0 0.0
    %629 = vmatprep.subr.mxu0 0.0
    %630 = vmatpush1.msra.mxu0 0.0
    %631 = vmatprep.subr.mxu0 0.0
    %632 = vmatpush1.msra.mxu0 0.0
    %633 = vmatprep.subr.mxu0 0.0
    %634 = vmatpush1.msra.mxu0 0.0
    %635 = vmatprep.subr.mxu0 0.0
    %636 = vmatpush1.msra.mxu0 0.0
    %637 = vmatprep.subr.mxu0 0.0
    %638 = vmatpush1.msra.mxu0 0.0
    %639 = vmatprep.subr.mxu0 0.0
    %640 = vmatpush1.msra.mxu0 0.0
    %641 = vmatprep.subr.mxu0 0.0
    %642 = vmatpush1.msra.mxu0 0.0
    %643 = vmatprep.subr.mxu0 0.0
    %644 = vmatpush1.msra.mxu0 0.0
    %645 = vmatprep.mubr.f32.mxu0 0.0
    %v646 = vand.u32 %v544, 4294901760
    %v647 = vsub.f32 %v544, %v646
    %v648 = vand.u32 %v647, 4294901760
    %v649 = vsub.f32 %v647, %v648
    %v650 = vand.u32 %v649, 4294901760
    %651 = vmatmul.mubr.f32.gmra.mrb[0].mxu0 %v650
    %v652 = vpop.f32.mrb[0].mxu0
    %v653 = vadd.f32 %v564, %v652
    %v654 = vpop.f32.mrb[0].mxu0
    %655 = vdwg.mxu0
    %656 = vmatprep.subr.mxu0 0.0
    %v657 = vand.u32 %v545, 4294901760
    %v658 = vsub.f32 %v545, %v657
    %v659 = vand.u32 %v658, 4294901760
    %v660 = vsub.f32 %v658, %v659
    %v661 = vand.u32 %v660, 4294901760
    %662 = vmatpush1.msra.mxu0 %v661
    %663 = vmatprep.subr.mxu0 0.0
    %v664 = vand.u32 %v546, 4294901760
    %v665 = vsub.f32 %v546, %v664
    %v666 = vand.u32 %v665, 4294901760
    %v667 = vsub.f32 %v665, %v666
    %v668 = vand.u32 %v667, 4294901760
    %669 = vmatpush1.msra.mxu0 %v668
    %670 = vmatprep.subr.mxu0 0.0
    %v671 = vand.u32 %v547, 4294901760
    %v672 = vsub.f32 %v547, %v671
    %v673 = vand.u32 %v672, 4294901760
    %v674 = vsub.f32 %v672, %v673
    %v675 = vand.u32 %v674, 4294901760
    %676 = vmatpush1.msra.mxu0 %v675
    %677 = vmatprep.subr.mxu0 0.0
    %v678 = vand.u32 %v548, 4294901760
    %v679 = vsub.f32 %v548, %v678
    %v680 = vand.u32 %v679, 4294901760
    %v681 = vsub.f32 %v679, %v680
    %v682 = vand.u32 %v681, 4294901760
    %683 = vmatpush1.msra.mxu0 %v682
    %684 = vmatprep.subr.mxu0 0.0
    %v685 = vand.u32 %v549, 4294901760
    %v686 = vsub.f32 %v549, %v685
    %v687 = vand.u32 %v686, 4294901760
    %v688 = vsub.f32 %v686, %v687
    %v689 = vand.u32 %v688, 4294901760
    %690 = vmatpush1.msra.mxu0 %v689
    %691 = vmatprep.subr.mxu0 0.0
    %v692 = vand.u32 %v550, 4294901760
    %v693 = vsub.f32 %v550, %v692
    %v694 = vand.u32 %v693, 4294901760
    %v695 = vsub.f32 %v693, %v694
    %v696 = vand.u32 %v695, 4294901760
    %697 = vmatpush1.msra.mxu0 %v696
    %698 = vmatprep.subr.mxu0 0.0
    %v699 = vand.u32 %v551, 4294901760
    %v700 = vsub.f32 %v551, %v699
    %v701 = vand.u32 %v700, 4294901760
    %v702 = vsub.f32 %v700, %v701
    %v703 = vand.u32 %v702, 4294901760
    %704 = vmatpush1.msra.mxu0 %v703
    %705 = vmatprep.subr.mxu0 0.0
    %v706 = vand.u32 %v552, 4294901760
    %v707 = vsub.f32 %v552, %v706
    %v708 = vand.u32 %v707, 4294901760
    %v709 = vsub.f32 %v707, %v708
    %v710 = vand.u32 %v709, 4294901760
    %711 = vmatpush1.msra.mxu0 %v710
    %712 = vmatprep.subr.mxu0 0.0
    %v713 = vand.u32 %v553, 4294901760
    %v714 = vsub.f32 %v553, %v713
    %v715 = vand.u32 %v714, 4294901760
    %v716 = vsub.f32 %v714, %v715
    %v717 = vand.u32 %v716, 4294901760
    %718 = vmatpush1.msra.mxu0 %v717
    %719 = vmatprep.subr.mxu0 0.0
    %v720 = vand.u32 %v554, 4294901760
    %v721 = vsub.f32 %v554, %v720
    %v722 = vand.u32 %v721, 4294901760
    %v723 = vsub.f32 %v721, %v722
    %v724 = vand.u32 %v723, 4294901760
    %725 = vmatpush1.msra.mxu0 %v724
    %726 = vmatprep.subr.mxu0 0.0
    %v727 = vand.u32 %v555, 4294901760
    %v728 = vsub.f32 %v555, %v727
    %v729 = vand.u32 %v728, 4294901760
    %v730 = vsub.f32 %v728, %v729
    %v731 = vand.u32 %v730, 4294901760
    %732 = vmatpush1.msra.mxu0 %v731
    %733 = vmatprep.subr.mxu0 0.0
    %v734 = vand.u32 %v556, 4294901760
    %v735 = vsub.f32 %v556, %v734
    %v736 = vand.u32 %v735, 4294901760
    %v737 = vsub.f32 %v735, %v736
    %v738 = vand.u32 %v737, 4294901760
    %739 = vmatpush1.msra.mxu0 %v738
    %740 = vmatprep.subr.mxu0 0.0
    %v741 = vand.u32 %v557, 4294901760
    %v742 = vsub.f32 %v557, %v741
    %v743 = vand.u32 %v742, 4294901760
    %v744 = vsub.f32 %v742, %v743
    %v745 = vand.u32 %v744, 4294901760
    %746 = vmatpush1.msra.mxu0 %v745
    %747 = vmatprep.subr.mxu0 0.0
    %v748 = vand.u32 %v558, 4294901760
    %v749 = vsub.f32 %v558, %v748
    %v750 = vand.u32 %v749, 4294901760
    %v751 = vsub.f32 %v749, %v750
    %v752 = vand.u32 %v751, 4294901760
    %753 = vmatpush1.msra.mxu0 %v752
    %754 = vmatprep.subr.mxu0 0.0
    %v755 = vand.u32 %v559, 4294901760
    %v756 = vsub.f32 %v559, %v755
    %v757 = vand.u32 %v756, 4294901760
    %v758 = vsub.f32 %v756, %v757
    %v759 = vand.u32 %v758, 4294901760
    %760 = vmatpush1.msra.mxu0 %v759
    %761 = vmatprep.subr.mxu0 0.0
    %v762 = vand.u32 %v560, 4294901760
    %v763 = vsub.f32 %v560, %v762
    %v764 = vand.u32 %v763, 4294901760
    %v765 = vsub.f32 %v763, %v764
    %v766 = vand.u32 %v765, 4294901760
    %767 = vmatpush1.msra.mxu0 %v766
    %768 = vmatprep.subr.mxu0 0.0
    %769 = vmatpush1.msra.mxu0 0.0
    %770 = vmatprep.subr.mxu0 0.0
    %771 = vmatpush1.msra.mxu0 0.0
    %772 = vmatprep.subr.mxu0 0.0
    %773 = vmatpush1.msra.mxu0 0.0
    %774 = vmatprep.subr.mxu0 0.0
    %775 = vmatpush1.msra.mxu0 0.0
    %776 = vmatprep.subr.mxu0 0.0
    %777 = vmatpush1.msra.mxu0 0.0
    %778 = vmatprep.subr.mxu0 0.0
    %779 = vmatpush1.msra.mxu0 0.0
    %780 = vmatprep.subr.mxu0 0.0
    %781 = vmatpush1.msra.mxu0 0.0
    %782 = vmatprep.subr.mxu0 0.0
    %783 = vmatpush1.msra.mxu0 0.0
    %784 = vmatprep.subr.mxu0 0.0
    %785 = vmatpush1.msra.mxu0 0.0
    %786 = vmatprep.subr.mxu0 0.0
    %787 = vmatpush1.msra.mxu0 0.0
    %788 = vmatprep.subr.mxu0 0.0
    %789 = vmatpush1.msra.mxu0 0.0
    %790 = vmatprep.subr.mxu0 0.0
    %791 = vmatpush1.msra.mxu0 0.0
    %792 = vmatprep.subr.mxu0 0.0
    %793 = vmatpush1.msra.mxu0 0.0
    %794 = vmatprep.subr.mxu0 0.0
    %795 = vmatpush1.msra.mxu0 0.0
    %796 = vmatprep.subr.mxu0 0.0
    %797 = vmatpush1.msra.mxu0 0.0
    %798 = vmatprep.subr.mxu0 0.0
    %799 = vmatpush1.msra.mxu0 0.0
    %800 = vmatprep.mubr.f32.mxu0 0.0
    %v801 = vand.u32 %v544, 4294901760
    %802 = vmatmul.mubr.f32.gmra.mrb[0].mxu0 %v801
    %v803 = vpop.f32.mrb[0].mxu0
    %v804 = vadd.f32 %v653, %v803
    %v805 = vpop.f32.mrb[0].mxu0
    %806 = vdwg.mxu0
    %807 = vmatprep.subr.mxu0 0.0
    %v808 = vand.u32 %v545, 4294901760
    %v809 = vsub.f32 %v545, %v808
    %810 = vmatpush1.msra.mxu0 %v809
    %811 = vmatprep.subr.mxu0 0.0
    %v812 = vand.u32 %v546, 4294901760
    %v813 = vsub.f32 %v546, %v812
    %814 = vmatpush1.msra.mxu0 %v813
    %815 = vmatprep.subr.mxu0 0.0
    %v816 = vand.u32 %v547, 4294901760
    %v817 = vsub.f32 %v547, %v816
    %818 = vmatpush1.msra.mxu0 %v817
    %819 = vmatprep.subr.mxu0 0.0
    %v820 = vand.u32 %v548, 4294901760
    %v821 = vsub.f32 %v548, %v820
    %822 = vmatpush1.msra.mxu0 %v821
    %823 = vmatprep.subr.mxu0 0.0
    %v824 = vand.u32 %v549, 4294901760
    %v825 = vsub.f32 %v549, %v824
    %826 = vmatpush1.msra.mxu0 %v825
    %827 = vmatprep.subr.mxu0 0.0
    %v828 = vand.u32 %v550, 4294901760
    %v829 = vsub.f32 %v550, %v828
    %830 = vmatpush1.msra.mxu0 %v829
    %831 = vmatprep.subr.mxu0 0.0
    %v832 = vand.u32 %v551, 4294901760
    %v833 = vsub.f32 %v551, %v832
    %834 = vmatpush1.msra.mxu0 %v833
    %835 = vmatprep.subr.mxu0 0.0
    %v836 = vand.u32 %v552, 4294901760
    %v837 = vsub.f32 %v552, %v836
    %838 = vmatpush1.msra.mxu0 %v837
    %839 = vmatprep.subr.mxu0 0.0
    %v840 = vand.u32 %v553, 4294901760
    %v841 = vsub.f32 %v553, %v840
    %842 = vmatpush1.msra.mxu0 %v841
    %843 = vmatprep.subr.mxu0 0.0
    %v844 = vand.u32 %v554, 4294901760
    %v845 = vsub.f32 %v554, %v844
    %846 = vmatpush1.msra.mxu0 %v845
    %847 = vmatprep.subr.mxu0 0.0
    %v848 = vand.u32 %v555, 4294901760
    %v849 = vsub.f32 %v555, %v848
    %850 = vmatpush1.msra.mxu0 %v849
    %851 = vmatprep.subr.mxu0 0.0
    %v852 = vand.u32 %v556, 4294901760
    %v853 = vsub.f32 %v556, %v852
    %854 = vmatpush1.msra.mxu0 %v853
    %855 = vmatprep.subr.mxu0 0.0
    %v856 = vand.u32 %v557, 4294901760
    %v857 = vsub.f32 %v557, %v856
    %858 = vmatpush1.msra.mxu0 %v857
    %859 = vmatprep.subr.mxu0 0.0
    %v860 = vand.u32 %v558, 4294901760
    %v861 = vsub.f32 %v558, %v860
    %862 = vmatpush1.msra.mxu0 %v861
    %863 = vmatprep.subr.mxu0 0.0
    %v864 = vand.u32 %v559, 4294901760
    %v865 = vsub.f32 %v559, %v864
    %866 = vmatpush1.msra.mxu0 %v865
    %867 = vmatprep.subr.mxu0 0.0
    %v868 = vand.u32 %v560, 4294901760
    %v869 = vsub.f32 %v560, %v868
    %870 = vmatpush1.msra.mxu0 %v869
    %871 = vmatprep.subr.mxu0 0.0
    %872 = vmatpush1.msra.mxu0 0.0
    %873 = vmatprep.subr.mxu0 0.0
    %874 = vmatpush1.msra.mxu0 0.0
    %875 = vmatprep.subr.mxu0 0.0
    %876 = vmatpush1.msra.mxu0 0.0
    %877 = vmatprep.subr.mxu0 0.0
    %878 = vmatpush1.msra.mxu0 0.0
    %879 = vmatprep.subr.mxu0 0.0
    %880 = vmatpush1.msra.mxu0 0.0
    %881 = vmatprep.subr.mxu0 0.0
    %882 = vmatpush1.msra.mxu0 0.0
    %883 = vmatprep.subr.mxu0 0.0
    %884 = vmatpush1.msra.mxu0 0.0
    %885 = vmatprep.subr.mxu0 0.0
    %886 = vmatpush1.msra.mxu0 0.0
    %887 = vmatprep.subr.mxu0 0.0
    %888 = vmatpush1.msra.mxu0 0.0
    %889 = vmatprep.subr.mxu0 0.0
    %890 = vmatpush1.msra.mxu0 0.0
    %891 = vmatprep.subr.mxu0 0.0
    %892 = vmatpush1.msra.mxu0 0.0
    %893 = vmatprep.subr.mxu0 0.0
    %894 = vmatpush1.msra.mxu0 0.0
    %895 = vmatprep.subr.mxu0 0.0
    %896 = vmatpush1.msra.mxu0 0.0
    %897 = vmatprep.subr.mxu0 0.0
    %898 = vmatpush1.msra.mxu0 0.0
    %899 = vmatprep.subr.mxu0 0.0
    %900 = vmatpush1.msra.mxu0 0.0
    %901 = vmatprep.subr.mxu0 0.0
    %902 = vmatpush1.msra.mxu0 0.0
    %903 = vmatprep.mubr.f32.mxu0 0.0
    %v904 = vand.u32 %v544, 4294901760
    %v905 = vsub.f32 %v544, %v904
    %906 = vmatmul.mubr.f32.gmra.mrb[0].mxu0 %v905
    %v907 = vpop.f32.mrb[0].mxu0
    %v908 = vadd.f32 %v804, %v907
    %v909 = vpop.f32.mrb[0].mxu0
    %910 = vdwg.mxu0
    %911 = vmatprep.subr.mxu0 0.0
    %v912 = vand.u32 %v545, 4294901760
    %913 = vmatpush1.msra.mxu0 %v912
    %914 = vmatprep.subr.mxu0 0.0
    %v915 = vand.u32 %v546, 4294901760
    %916 = vmatpush1.msra.mxu0 %v915
    %917 = vmatprep.subr.mxu0 0.0
    %v918 = vand.u32 %v547, 4294901760
    %919 = vmatpush1.msra.mxu0 %v918
    %920 = vmatprep.subr.mxu0 0.0
    %v921 = vand.u32 %v548, 4294901760
    %922 = vmatpush1.msra.mxu0 %v921
    %923 = vmatprep.subr.mxu0 0.0
    %v924 = vand.u32 %v549, 4294901760
    %925 = vmatpush1.msra.mxu0 %v924
    %926 = vmatprep.subr.mxu0 0.0
    %v927 = vand.u32 %v550, 4294901760
    %928 = vmatpush1.msra.mxu0 %v927
    %929 = vmatprep.subr.mxu0 0.0
    %v930 = vand.u32 %v551, 4294901760
    %931 = vmatpush1.msra.mxu0 %v930
    %932 = vmatprep.subr.mxu0 0.0
    %v933 = vand.u32 %v552, 4294901760
    %934 = vmatpush1.msra.mxu0 %v933
    %935 = vmatprep.subr.mxu0 0.0
    %v936 = vand.u32 %v553, 4294901760
    %937 = vmatpush1.msra.mxu0 %v936
    %938 = vmatprep.subr.mxu0 0.0
    %v939 = vand.u32 %v554, 4294901760
    %940 = vmatpush1.msra.mxu0 %v939
    %941 = vmatprep.subr.mxu0 0.0
    %v942 = vand.u32 %v555, 4294901760
    %943 = vmatpush1.msra.mxu0 %v942
    %944 = vmatprep.subr.mxu0 0.0
    %v945 = vand.u32 %v556, 4294901760
    %946 = vmatpush1.msra.mxu0 %v945
    %947 = vmatprep.subr.mxu0 0.0
    %v948 = vand.u32 %v557, 4294901760
    %949 = vmatpush1.msra.mxu0 %v948
    %950 = vmatprep.subr.mxu0 0.0
    %v951 = vand.u32 %v558, 4294901760
    %952 = vmatpush1.msra.mxu0 %v951
    %953 = vmatprep.subr.mxu0 0.0
    %v954 = vand.u32 %v559, 4294901760
    %955 = vmatpush1.msra.mxu0 %v954
    %956 = vmatprep.subr.mxu0 0.0
    %v957 = vand.u32 %v560, 4294901760
    %958 = vmatpush1.msra.mxu0 %v957
    %959 = vmatprep.subr.mxu0 0.0
    %960 = vmatpush1.msra.mxu0 0.0
    %961 = vmatprep.subr.mxu0 0.0
    %962 = vmatpush1.msra.mxu0 0.0
    %963 = vmatprep.subr.mxu0 0.0
    %964 = vmatpush1.msra.mxu0 0.0
    %965 = vmatprep.subr.mxu0 0.0
    %966 = vmatpush1.msra.mxu0 0.0
    %967 = vmatprep.subr.mxu0 0.0
    %968 = vmatpush1.msra.mxu0 0.0
    %969 = vmatprep.subr.mxu0 0.0
    %970 = vmatpush1.msra.mxu0 0.0
    %971 = vmatprep.subr.mxu0 0.0
    %972 = vmatpush1.msra.mxu0 0.0
    %973 = vmatprep.subr.mxu0 0.0
    %974 = vmatpush1.msra.mxu0 0.0
    %975 = vmatprep.subr.mxu0 0.0
    %976 = vmatpush1.msra.mxu0 0.0
    %977 = vmatprep.subr.mxu0 0.0
    %978 = vmatpush1.msra.mxu0 0.0
    %979 = vmatprep.subr.mxu0 0.0
    %980 = vmatpush1.msra.mxu0 0.0
    %981 = vmatprep.subr.mxu0 0.0
    %982 = vmatpush1.msra.mxu0 0.0
    %983 = vmatprep.subr.mxu0 0.0
    %984 = vmatpush1.msra.mxu0 0.0
    %985 = vmatprep.subr.mxu0 0.0
    %986 = vmatpush1.msra.mxu0 0.0
    %987 = vmatprep.subr.mxu0 0.0
    %988 = vmatpush1.msra.mxu0 0.0
    %989 = vmatprep.subr.mxu0 0.0
    %990 = vmatpush1.msra.mxu0 0.0
    %991 = vmatprep.mubr.f32.mxu0 0.0
    %v992 = vand.u32 %v544, 4294901760
    %v993 = vsub.f32 %v544, %v992
    %v994 = vand.u32 %v993, 4294901760
    %995 = vmatmul.mubr.f32.gmra.mrb[0].mxu0 %v994
    %v996 = vpop.f32.mrb[0].mxu0
    %v997 = vadd.f32 %v908, %v996
    %v998 = vpop.f32.mrb[0].mxu0
    %999 = vdwg.mxu0
    %1000 = vmatprep.subr.mxu0 0.0
    %v1001 = vand.u32 %v545, 4294901760
    %v1002 = vsub.f32 %v545, %v1001
    %v1003 = vand.u32 %v1002, 4294901760
    %1004 = vmatpush1.msra.mxu0 %v1003
    %1005 = vmatprep.subr.mxu0 0.0
    %v1006 = vand.u32 %v546, 4294901760
    %v1007 = vsub.f32 %v546, %v1006
    %v1008 = vand.u32 %v1007, 4294901760
    %1009 = vmatpush1.msra.mxu0 %v1008
    %1010 = vmatprep.subr.mxu0 0.0
    %v1011 = vand.u32 %v547, 4294901760
    %v1012 = vsub.f32 %v547, %v1011
    %v1013 = vand.u32 %v1012, 4294901760
    %1014 = vmatpush1.msra.mxu0 %v1013
    %1015 = vmatprep.subr.mxu0 0.0
    %v1016 = vand.u32 %v548, 4294901760
    %v1017 = vsub.f32 %v548, %v1016
    %v1018 = vand.u32 %v1017, 4294901760
    %1019 = vmatpush1.msra.mxu0 %v1018
    %1020 = vmatprep.subr.mxu0 0.0
    %v1021 = vand.u32 %v549, 4294901760
    %v1022 = vsub.f32 %v549, %v1021
    %v1023 = vand.u32 %v1022, 4294901760
    %1024 = vmatpush1.msra.mxu0 %v1023
    %1025 = vmatprep.subr.mxu0 0.0
    %v1026 = vand.u32 %v550, 4294901760
    %v1027 = vsub.f32 %v550, %v1026
    %v1028 = vand.u32 %v1027, 4294901760
    %1029 = vmatpush1.msra.mxu0 %v1028
    %1030 = vmatprep.subr.mxu0 0.0
    %v1031 = vand.u32 %v551, 4294901760
    %v1032 = vsub.f32 %v551, %v1031
    %v1033 = vand.u32 %v1032, 4294901760
    %1034 = vmatpush1.msra.mxu0 %v1033
    %1035 = vmatprep.subr.mxu0 0.0
    %v1036 = vand.u32 %v552, 4294901760
    %v1037 = vsub.f32 %v552, %v1036
    %v1038 = vand.u32 %v1037, 4294901760
    %1039 = vmatpush1.msra.mxu0 %v1038
    %1040 = vmatprep.subr.mxu0 0.0
    %v1041 = vand.u32 %v553, 4294901760
    %v1042 = vsub.f32 %v553, %v1041
    %v1043 = vand.u32 %v1042, 4294901760
    %1044 = vmatpush1.msra.mxu0 %v1043
    %1045 = vmatprep.subr.mxu0 0.0
    %v1046 = vand.u32 %v554, 4294901760
    %v1047 = vsub.f32 %v554, %v1046
    %v1048 = vand.u32 %v1047, 4294901760
    %1049 = vmatpush1.msra.mxu0 %v1048
    %1050 = vmatprep.subr.mxu0 0.0
    %v1051 = vand.u32 %v555, 4294901760
    %v1052 = vsub.f32 %v555, %v1051
    %v1053 = vand.u32 %v1052, 4294901760
    %1054 = vmatpush1.msra.mxu0 %v1053
    %1055 = vmatprep.subr.mxu0 0.0
    %v1056 = vand.u32 %v556, 4294901760
    %v1057 = vsub.f32 %v556, %v1056
    %v1058 = vand.u32 %v1057, 4294901760
    %1059 = vmatpush1.msra.mxu0 %v1058
    %1060 = vmatprep.subr.mxu0 0.0
    %v1061 = vand.u32 %v557, 4294901760
    %v1062 = vsub.f32 %v557, %v1061
    %v1063 = vand.u32 %v1062, 4294901760
    %1064 = vmatpush1.msra.mxu0 %v1063
    %1065 = vmatprep.subr.mxu0 0.0
    %v1066 = vand.u32 %v558, 4294901760
    %v1067 = vsub.f32 %v558, %v1066
    %v1068 = vand.u32 %v1067, 4294901760
    %1069 = vmatpush1.msra.mxu0 %v1068
    %1070 = vmatprep.subr.mxu0 0.0
    %v1071 = vand.u32 %v559, 4294901760
    %v1072 = vsub.f32 %v559, %v1071
    %v1073 = vand.u32 %v1072, 4294901760
    %1074 = vmatpush1.msra.mxu0 %v1073
    %1075 = vmatprep.subr.mxu0 0.0
    %v1076 = vand.u32 %v560, 4294901760
    %v1077 = vsub.f32 %v560, %v1076
    %v1078 = vand.u32 %v1077, 4294901760
    %1079 = vmatpush1.msra.mxu0 %v1078
    %1080 = vmatprep.subr.mxu0 0.0
    %1081 = vmatpush1.msra.mxu0 0.0
    %1082 = vmatprep.subr.mxu0 0.0
    %1083 = vmatpush1.msra.mxu0 0.0
    %1084 = vmatprep.subr.mxu0 0.0
    %1085 = vmatpush1.msra.mxu0 0.0
    %1086 = vmatprep.subr.mxu0 0.0
    %1087 = vmatpush1.msra.mxu0 0.0
    %1088 = vmatprep.subr.mxu0 0.0
    %1089 = vmatpush1.msra.mxu0 0.0
    %1090 = vmatprep.subr.mxu0 0.0
    %1091 = vmatpush1.msra.mxu0 0.0
    %1092 = vmatprep.subr.mxu0 0.0
    %1093 = vmatpush1.msra.mxu0 0.0
    %1094 = vmatprep.subr.mxu0 0.0
    %1095 = vmatpush1.msra.mxu0 0.0
    %1096 = vmatprep.subr.mxu0 0.0
    %1097 = vmatpush1.msra.mxu0 0.0
    %1098 = vmatprep.subr.mxu0 0.0
    %1099 = vmatpush1.msra.mxu0 0.0
    %1100 = vmatprep.subr.mxu0 0.0
    %1101 = vmatpush1.msra.mxu0 0.0
    %1102 = vmatprep.subr.mxu0 0.0
    %1103 = vmatpush1.msra.mxu0 0.0
    %1104 = vmatprep.subr.mxu0 0.0
    %1105 = vmatpush1.msra.mxu0 0.0
    %1106 = vmatprep.subr.mxu0 0.0
    %1107 = vmatpush1.msra.mxu0 0.0
    %1108 = vmatprep.subr.mxu0 0.0
    %1109 = vmatpush1.msra.mxu0 0.0
    %1110 = vmatprep.subr.mxu0 0.0
    %1111 = vmatpush1.msra.mxu0 0.0
    %1112 = vmatprep.mubr.f32.mxu0 0.0
    %v1113 = vand.u32 %v544, 4294901760
    %1114 = vmatmul.mubr.f32.gmra.mrb[0].mxu0 %v1113
    %v1115 = vpop.f32.mrb[0].mxu0
    %v1116 = vadd.f32 %v997, %v1115
    %v1117 = vpop.f32.mrb[0].mxu0
    %1118 = vdwg.mxu0
    %1119 = vmatprep.subr.mxu0 0.0
    %v1120 = vand.u32 %v545, 4294901760
    %1121 = vmatpush1.msra.mxu0 %v1120
    %1122 = vmatprep.subr.mxu0 0.0
    %v1123 = vand.u32 %v546, 4294901760
    %1124 = vmatpush1.msra.mxu0 %v1123
    %1125 = vmatprep.subr.mxu0 0.0
    %v1126 = vand.u32 %v547, 4294901760
    %1127 = vmatpush1.msra.mxu0 %v1126
    %1128 = vmatprep.subr.mxu0 0.0
    %v1129 = vand.u32 %v548, 4294901760
    %1130 = vmatpush1.msra.mxu0 %v1129
    %1131 = vmatprep.subr.mxu0 0.0
    %v1132 = vand.u32 %v549, 4294901760
    %1133 = vmatpush1.msra.mxu0 %v1132
    %1134 = vmatprep.subr.mxu0 0.0
    %v1135 = vand.u32 %v550, 4294901760
    %1136 = vmatpush1.msra.mxu0 %v1135
    %1137 = vmatprep.subr.mxu0 0.0
    %v1138 = vand.u32 %v551, 4294901760
    %1139 = vmatpush1.msra.mxu0 %v1138
    %1140 = vmatprep.subr.mxu0 0.0
    %v1141 = vand.u32 %v552, 4294901760
    %1142 = vmatpush1.msra.mxu0 %v1141
    %1143 = vmatprep.subr.mxu0 0.0
    %v1144 = vand.u32 %v553, 4294901760
    %1145 = vmatpush1.msra.mxu0 %v1144
    %1146 = vmatprep.subr.mxu0 0.0
    %v1147 = vand.u32 %v554, 4294901760
    %1148 = vmatpush1.msra.mxu0 %v1147
    %1149 = vmatprep.subr.mxu0 0.0
    %v1150 = vand.u32 %v555, 4294901760
    %1151 = vmatpush1.msra.mxu0 %v1150
    %1152 = vmatprep.subr.mxu0 0.0
    %v1153 = vand.u32 %v556, 4294901760
    %1154 = vmatpush1.msra.mxu0 %v1153
    %1155 = vmatprep.subr.mxu0 0.0
    %v1156 = vand.u32 %v557, 4294901760
    %1157 = vmatpush1.msra.mxu0 %v1156
    %1158 = vmatprep.subr.mxu0 0.0
    %v1159 = vand.u32 %v558, 4294901760
    %1160 = vmatpush1.msra.mxu0 %v1159
    %1161 = vmatprep.subr.mxu0 0.0
    %v1162 = vand.u32 %v559, 4294901760
    %1163 = vmatpush1.msra.mxu0 %v1162
    %1164 = vmatprep.subr.mxu0 0.0
    %v1165 = vand.u32 %v560, 4294901760
    %1166 = vmatpush1.msra.mxu0 %v1165
    %1167 = vmatprep.subr.mxu0 0.0
    %1168 = vmatpush1.msra.mxu0 0.0
    %1169 = vmatprep.subr.mxu0 0.0
    %1170 = vmatpush1.msra.mxu0 0.0
    %1171 = vmatprep.subr.mxu0 0.0
    %1172 = vmatpush1.msra.mxu0 0.0
    %1173 = vmatprep.subr.mxu0 0.0
    %1174 = vmatpush1.msra.mxu0 0.0
    %1175 = vmatprep.subr.mxu0 0.0
    %1176 = vmatpush1.msra.mxu0 0.0
    %1177 = vmatprep.subr.mxu0 0.0
    %1178 = vmatpush1.msra.mxu0 0.0
    %1179 = vmatprep.subr.mxu0 0.0
    %1180 = vmatpush1.msra.mxu0 0.0
    %1181 = vmatprep.subr.mxu0 0.0
    %1182 = vmatpush1.msra.mxu0 0.0
    %1183 = vmatprep.subr.mxu0 0.0
    %1184 = vmatpush1.msra.mxu0 0.0
    %1185 = vmatprep.subr.mxu0 0.0
    %1186 = vmatpush1.msra.mxu0 0.0
    %1187 = vmatprep.subr.mxu0 0.0
    %1188 = vmatpush1.msra.mxu0 0.0
    %1189 = vmatprep.subr.mxu0 0.0
    %1190 = vmatpush1.msra.mxu0 0.0
    %1191 = vmatprep.subr.mxu0 0.0
    %1192 = vmatpush1.msra.mxu0 0.0
    %1193 = vmatprep.subr.mxu0 0.0
    %1194 = vmatpush1.msra.mxu0 0.0
    %1195 = vmatprep.subr.mxu0 0.0
    %1196 = vmatpush1.msra.mxu0 0.0
    %1197 = vmatprep.subr.mxu0 0.0
    %1198 = vmatpush1.msra.mxu0 0.0
    %1199 = vmatprep.mubr.f32.mxu0 0.0
    %v1200 = vand.u32 %v544, 4294901760
    %1201 = vmatmul.mubr.f32.gmra.mrb[0].mxu0 %v1200
    %v1202 = vpop.f32.mrb[0].mxu0
    %v1203 = vadd.f32 %v1116, %v1202
    %v1204 = vpop.f32.mrb[0].mxu0
    %1205 = vdwg.mxu0
    %v1206 = vmax.f32 %v1203, 0.0
    %v1207 = vld [vmem:[#allocation7] sm:$0xff]
    %v1208 = vld [vmem:[#allocation7 + $0x8] sm:$0xff]
    %v1209 = vld [vmem:[#allocation7 + $0x10] sm:$0xff]
    %v1210 = vld [vmem:[#allocation7 + $0x18] sm:$0xff]
    %v1211 = vld [vmem:[#allocation7 + $0x20] sm:$0xff]
    %v1212 = vld [vmem:[#allocation7 + $0x28] sm:$0xff]
    %v1213 = vld [vmem:[#allocation7 + $0x30] sm:$0xff]
    %v1214 = vld [vmem:[#allocation7 + $0x38] sm:$0xff]
    %v1215 = vld [vmem:[#allocation7 + $0x40] sm:$0xff]
    %v1216 = vld [vmem:[#allocation7 + $0x48] sm:$0xff]
    %v1217 = vld [vmem:[#allocation7 + $0x50] sm:$0xff]
    %v1218 = vld [vmem:[#allocation7 + $0x58] sm:$0xff]
    %v1219 = vld [vmem:[#allocation7 + $0x60] sm:$0xff]
    %v1220 = vld [vmem:[#allocation7 + $0x68] sm:$0xff]
    %v1221 = vld [vmem:[#allocation7 + $0x70] sm:$0xff]
    %v1222 = vld [vmem:[#allocation7 + $0x78] sm:$0xff]
    %v1223 = vlaneseq
    %v1224 = vshrl.u32 %v1223, 7
    %v1225 = vsub.s32 2, %v1224
    %v1226 = vrot.slane %v73, %v1225
    %1227 = vmatprep.subr.mxu0 0.0
    %v1228 = vand.u32 %v1207, 4294901760
    %1229 = vmatpush1.msra.mxu0 %v1228
    %1230 = vmatprep.subr.mxu0 0.0
    %v1231 = vand.u32 %v1208, 4294901760
    %1232 = vmatpush1.msra.mxu0 %v1231
    %1233 = vmatprep.subr.mxu0 0.0
    %v1234 = vand.u32 %v1209, 4294901760
    %1235 = vmatpush1.msra.mxu0 %v1234
    %1236 = vmatprep.subr.mxu0 0.0
    %v1237 = vand.u32 %v1210, 4294901760
    %1238 = vmatpush1.msra.mxu0 %v1237
    %1239 = vmatprep.subr.mxu0 0.0
    %v1240 = vand.u32 %v1211, 4294901760
    %1241 = vmatpush1.msra.mxu0 %v1240
    %1242 = vmatprep.subr.mxu0 0.0
    %v1243 = vand.u32 %v1212, 4294901760
    %1244 = vmatpush1.msra.mxu0 %v1243
    %1245 = vmatprep.subr.mxu0 0.0
    %v1246 = vand.u32 %v1213, 4294901760
    %1247 = vmatpush1.msra.mxu0 %v1246
    %1248 = vmatprep.subr.mxu0 0.0
    %v1249 = vand.u32 %v1214, 4294901760
    %1250 = vmatpush1.msra.mxu0 %v1249
    %1251 = vmatprep.subr.mxu0 0.0
    %v1252 = vand.u32 %v1215, 4294901760
    %1253 = vmatpush1.msra.mxu0 %v1252
    %1254 = vmatprep.subr.mxu0 0.0
    %v1255 = vand.u32 %v1216, 4294901760
    %1256 = vmatpush1.msra.mxu0 %v1255
    %1257 = vmatprep.subr.mxu0 0.0
    %v1258 = vand.u32 %v1217, 4294901760
    %1259 = vmatpush1.msra.mxu0 %v1258
    %1260 = vmatprep.subr.mxu0 0.0
    %v1261 = vand.u32 %v1218, 4294901760
    %1262 = vmatpush1.msra.mxu0 %v1261
    %1263 = vmatprep.subr.mxu0 0.0
    %v1264 = vand.u32 %v1219, 4294901760
    %1265 = vmatpush1.msra.mxu0 %v1264
    %1266 = vmatprep.subr.mxu0 0.0
    %v1267 = vand.u32 %v1220, 4294901760
    %1268 = vmatpush1.msra.mxu0 %v1267
    %1269 = vmatprep.subr.mxu0 0.0
    %v1270 = vand.u32 %v1221, 4294901760
    %1271 = vmatpush1.msra.mxu0 %v1270
    %1272 = vmatprep.subr.mxu0 0.0
    %v1273 = vand.u32 %v1222, 4294901760
    %1274 = vmatpush1.msra.mxu0 %v1273
    %1275 = vmatprep.subr.mxu0 0.0
    %1276 = vmatpush1.msra.mxu0 0.0
    %1277 = vmatprep.subr.mxu0 0.0
    %1278 = vmatpush1.msra.mxu0 0.0
    %1279 = vmatprep.subr.mxu0 0.0
    %1280 = vmatpush1.msra.mxu0 0.0
    %1281 = vmatprep.subr.mxu0 0.0
    %1282 = vmatpush1.msra.mxu0 0.0
    %1283 = vmatprep.subr.mxu0 0.0
    %1284 = vmatpush1.msra.mxu0 0.0
    %1285 = vmatprep.subr.mxu0 0.0
    %1286 = vmatpush1.msra.mxu0 0.0
    %1287 = vmatprep.subr.mxu0 0.0
    %1288 = vmatpush1.msra.mxu0 0.0
    %1289 = vmatprep.subr.mxu0 0.0
    %1290 = vmatpush1.msra.mxu0 0.0
    %1291 = vmatprep.subr.mxu0 0.0
    %1292 = vmatpush1.msra.mxu0 0.0
    %1293 = vmatprep.subr.mxu0 0.0
    %1294 = vmatpush1.msra.mxu0 0.0
    %1295 = vmatprep.subr.mxu0 0.0
    %1296 = vmatpush1.msra.mxu0 0.0
    %1297 = vmatprep.subr.mxu0 0.0
    %1298 = vmatpush1.msra.mxu0 0.0
    %1299 = vmatprep.subr.mxu0 0.0
    %1300 = vmatpush1.msra.mxu0 0.0
    %1301 = vmatprep.subr.mxu0 0.0
    %1302 = vmatpush1.msra.mxu0 0.0
    %1303 = vmatprep.subr.mxu0 0.0
    %1304 = vmatpush1.msra.mxu0 0.0
    %1305 = vmatprep.subr.mxu0 0.0
    %1306 = vmatpush1.msra.mxu0 0.0
    %1307 = vmatprep.mubr.f32.mxu0 0.0
    %v1308 = vand.u32 %v1206, 4294901760
    %v1309 = vsub.f32 %v1206, %v1308
    %v1310 = vand.u32 %v1309, 4294901760
    %v1311 = vsub.f32 %v1309, %v1310
    %v1312 = vand.u32 %v1311, 4294901760
    %1313 = vmatmul.mubr.f32.gmra.mrb[0].mxu0 %v1312
    %v1314 = vpop.f32.mrb[0].mxu0
    %v1315 = vadd.f32 %v1226, %v1314
    %v1316 = vpop.f32.mrb[0].mxu0
    %1317 = vdwg.mxu0
    %1318 = vmatprep.subr.mxu0 0.0
    %v1319 = vand.u32 %v1207, 4294901760
    %v1320 = vsub.f32 %v1207, %v1319
    %v1321 = vand.u32 %v1320, 4294901760
    %v1322 = vsub.f32 %v1320, %v1321
    %v1323 = vand.u32 %v1322, 4294901760
    %1324 = vmatpush1.msra.mxu0 %v1323
    %1325 = vmatprep.subr.mxu0 0.0
    %v1326 = vand.u32 %v1208, 4294901760
    %v1327 = vsub.f32 %v1208, %v1326
    %v1328 = vand.u32 %v1327, 4294901760
    %v1329 = vsub.f32 %v1327, %v1328
    %v1330 = vand.u32 %v1329, 4294901760
    %1331 = vmatpush1.msra.mxu0 %v1330
    %1332 = vmatprep.subr.mxu0 0.0
    %v1333 = vand.u32 %v1209, 4294901760
    %v1334 = vsub.f32 %v1209, %v1333
    %v1335 = vand.u32 %v1334, 4294901760
    %v1336 = vsub.f32 %v1334, %v1335
    %v1337 = vand.u32 %v1336, 4294901760
    %1338 = vmatpush1.msra.mxu0 %v1337
    %1339 = vmatprep.subr.mxu0 0.0
    %v1340 = vand.u32 %v1210, 4294901760
    %v1341 = vsub.f32 %v1210, %v1340
    %v1342 = vand.u32 %v1341, 4294901760
    %v1343 = vsub.f32 %v1341, %v1342
    %v1344 = vand.u32 %v1343, 4294901760
    %1345 = vmatpush1.msra.mxu0 %v1344
    %1346 = vmatprep.subr.mxu0 0.0
    %v1347 = vand.u32 %v1211, 4294901760
    %v1348 = vsub.f32 %v1211, %v1347
    %v1349 = vand.u32 %v1348, 4294901760
    %v1350 = vsub.f32 %v1348, %v1349
    %v1351 = vand.u32 %v1350, 4294901760
    %1352 = vmatpush1.msra.mxu0 %v1351
    %1353 = vmatprep.subr.mxu0 0.0
    %v1354 = vand.u32 %v1212, 4294901760
    %v1355 = vsub.f32 %v1212, %v1354
    %v1356 = vand.u32 %v1355, 4294901760
    %v1357 = vsub.f32 %v1355, %v1356
    %v1358 = vand.u32 %v1357, 4294901760
    %1359 = vmatpush1.msra.mxu0 %v1358
    %1360 = vmatprep.subr.mxu0 0.0
    %v1361 = vand.u32 %v1213, 4294901760
    %v1362 = vsub.f32 %v1213, %v1361
    %v1363 = vand.u32 %v1362, 4294901760
    %v1364 = vsub.f32 %v1362, %v1363
    %v1365 = vand.u32 %v1364, 4294901760
    %1366 = vmatpush1.msra.mxu0 %v1365
    %1367 = vmatprep.subr.mxu0 0.0
    %v1368 = vand.u32 %v1214, 4294901760
    %v1369 = vsub.f32 %v1214, %v1368
    %v1370 = vand.u32 %v1369, 4294901760
    %v1371 = vsub.f32 %v1369, %v1370
    %v1372 = vand.u32 %v1371, 4294901760
    %1373 = vmatpush1.msra.mxu0 %v1372
    %1374 = vmatprep.subr.mxu0 0.0
    %v1375 = vand.u32 %v1215, 4294901760
    %v1376 = vsub.f32 %v1215, %v1375
    %v1377 = vand.u32 %v1376, 4294901760
    %v1378 = vsub.f32 %v1376, %v1377
    %v1379 = vand.u32 %v1378, 4294901760
    %1380 = vmatpush1.msra.mxu0 %v1379
    %1381 = vmatprep.subr.mxu0 0.0
    %v1382 = vand.u32 %v1216, 4294901760
    %v1383 = vsub.f32 %v1216, %v1382
    %v1384 = vand.u32 %v1383, 4294901760
    %v1385 = vsub.f32 %v1383, %v1384
    %v1386 = vand.u32 %v1385, 4294901760
    %1387 = vmatpush1.msra.mxu0 %v1386
    %1388 = vmatprep.subr.mxu0 0.0
    %v1389 = vand.u32 %v1217, 4294901760
    %v1390 = vsub.f32 %v1217, %v1389
    %v1391 = vand.u32 %v1390, 4294901760
    %v1392 = vsub.f32 %v1390, %v1391
    %v1393 = vand.u32 %v1392, 4294901760
    %1394 = vmatpush1.msra.mxu0 %v1393
    %1395 = vmatprep.subr.mxu0 0.0
    %v1396 = vand.u32 %v1218, 4294901760
    %v1397 = vsub.f32 %v1218, %v1396
    %v1398 = vand.u32 %v1397, 4294901760
    %v1399 = vsub.f32 %v1397, %v1398
    %v1400 = vand.u32 %v1399, 4294901760
    %1401 = vmatpush1.msra.mxu0 %v1400
    %1402 = vmatprep.subr.mxu0 0.0
    %v1403 = vand.u32 %v1219, 4294901760
    %v1404 = vsub.f32 %v1219, %v1403
    %v1405 = vand.u32 %v1404, 4294901760
    %v1406 = vsub.f32 %v1404, %v1405
    %v1407 = vand.u32 %v1406, 4294901760
    %1408 = vmatpush1.msra.mxu0 %v1407
    %1409 = vmatprep.subr.mxu0 0.0
    %v1410 = vand.u32 %v1220, 4294901760
    %v1411 = vsub.f32 %v1220, %v1410
    %v1412 = vand.u32 %v1411, 4294901760
    %v1413 = vsub.f32 %v1411, %v1412
    %v1414 = vand.u32 %v1413, 4294901760
    %1415 = vmatpush1.msra.mxu0 %v1414
    %1416 = vmatprep.subr.mxu0 0.0
    %v1417 = vand.u32 %v1221, 4294901760
    %v1418 = vsub.f32 %v1221, %v1417
    %v1419 = vand.u32 %v1418, 4294901760
    %v1420 = vsub.f32 %v1418, %v1419
    %v1421 = vand.u32 %v1420, 4294901760
    %1422 = vmatpush1.msra.mxu0 %v1421
    %1423 = vmatprep.subr.mxu0 0.0
    %v1424 = vand.u32 %v1222, 4294901760
    %v1425 = vsub.f32 %v1222, %v1424
    %v1426 = vand.u32 %v1425, 4294901760
    %v1427 = vsub.f32 %v1425, %v1426
    %v1428 = vand.u32 %v1427, 4294901760
    %1429 = vmatpush1.msra.mxu0 %v1428
    %1430 = vmatprep.subr.mxu0 0.0
    %1431 = vmatpush1.msra.mxu0 0.0
    %1432 = vmatprep.subr.mxu0 0.0
    %1433 = vmatpush1.msra.mxu0 0.0
    %1434 = vmatprep.subr.mxu0 0.0
    %1435 = vmatpush1.msra.mxu0 0.0
    %1436 = vmatprep.subr.mxu0 0.0
    %1437 = vmatpush1.msra.mxu0 0.0
    %1438 = vmatprep.subr.mxu0 0.0
    %1439 = vmatpush1.msra.mxu0 0.0
    %1440 = vmatprep.subr.mxu0 0.0
    %1441 = vmatpush1.msra.mxu0 0.0
    %1442 = vmatprep.subr.mxu0 0.0
    %1443 = vmatpush1.msra.mxu0 0.0
    %1444 = vmatprep.subr.mxu0 0.0
    %1445 = vmatpush1.msra.mxu0 0.0
    %1446 = vmatprep.subr.mxu0 0.0
    %1447 = vmatpush1.msra.mxu0 0.0
    %1448 = vmatprep.subr.mxu0 0.0
    %1449 = vmatpush1.msra.mxu0 0.0
    %1450 = vmatprep.subr.mxu0 0.0
    %1451 = vmatpush1.msra.mxu0 0.0
    %1452 = vmatprep.subr.mxu0 0.0
    %1453 = vmatpush1.msra.mxu0 0.0
    %1454 = vmatprep.subr.mxu0 0.0
    %1455 = vmatpush1.msra.mxu0 0.0
    %1456 = vmatprep.subr.mxu0 0.0
    %1457 = vmatpush1.msra.mxu0 0.0
    %1458 = vmatprep.subr.mxu0 0.0
    %1459 = vmatpush1.msra.mxu0 0.0
    %1460 = vmatprep.subr.mxu0 0.0
    %1461 = vmatpush1.msra.mxu0 0.0
    %1462 = vmatprep.mubr.f32.mxu0 0.0
    %v1463 = vand.u32 %v1206, 4294901760
    %1464 = vmatmul.mubr.f32.gmra.mrb[0].mxu0 %v1463
    %v1465 = vpop.f32.mrb[0].mxu0
    %v1466 = vadd.f32 %v1315, %v1465
    %v1467 = vpop.f32.mrb[0].mxu0
    %1468 = vdwg.mxu0
    %1469 = vmatprep.subr.mxu0 0.0
    %v1470 = vand.u32 %v1207, 4294901760
    %v1471 = vsub.f32 %v1207, %v1470
    %1472 = vmatpush1.msra.mxu0 %v1471
    %1473 = vmatprep.subr.mxu0 0.0
    %v1474 = vand.u32 %v1208, 4294901760
    %v1475 = vsub.f32 %v1208, %v1474
    %1476 = vmatpush1.msra.mxu0 %v1475
    %1477 = vmatprep.subr.mxu0 0.0
    %v1478 = vand.u32 %v1209, 4294901760
    %v1479 = vsub.f32 %v1209, %v1478
    %1480 = vmatpush1.msra.mxu0 %v1479
    %1481 = vmatprep.subr.mxu0 0.0
    %v1482 = vand.u32 %v1210, 4294901760
    %v1483 = vsub.f32 %v1210, %v1482
    %1484 = vmatpush1.msra.mxu0 %v1483
    %1485 = vmatprep.subr.mxu0 0.0
    %v1486 = vand.u32 %v1211, 4294901760
    %v1487 = vsub.f32 %v1211, %v1486
    %1488 = vmatpush1.msra.mxu0 %v1487
    %1489 = vmatprep.subr.mxu0 0.0
    %v1490 = vand.u32 %v1212, 4294901760
    %v1491 = vsub.f32 %v1212, %v1490
    %1492 = vmatpush1.msra.mxu0 %v1491
    %1493 = vmatprep.subr.mxu0 0.0
    %v1494 = vand.u32 %v1213, 4294901760
    %v1495 = vsub.f32 %v1213, %v1494
    %1496 = vmatpush1.msra.mxu0 %v1495
    %1497 = vmatprep.subr.mxu0 0.0
    %v1498 = vand.u32 %v1214, 4294901760
    %v1499 = vsub.f32 %v1214, %v1498
    %1500 = vmatpush1.msra.mxu0 %v1499
    %1501 = vmatprep.subr.mxu0 0.0
    %v1502 = vand.u32 %v1215, 4294901760
    %v1503 = vsub.f32 %v1215, %v1502
    %1504 = vmatpush1.msra.mxu0 %v1503
    %1505 = vmatprep.subr.mxu0 0.0
    %v1506 = vand.u32 %v1216, 4294901760
    %v1507 = vsub.f32 %v1216, %v1506
    %1508 = vmatpush1.msra.mxu0 %v1507
    %1509 = vmatprep.subr.mxu0 0.0
    %v1510 = vand.u32 %v1217, 4294901760
    %v1511 = vsub.f32 %v1217, %v1510
    %1512 = vmatpush1.msra.mxu0 %v1511
    %1513 = vmatprep.subr.mxu0 0.0
    %v1514 = vand.u32 %v1218, 4294901760
    %v1515 = vsub.f32 %v1218, %v1514
    %1516 = vmatpush1.msra.mxu0 %v1515
    %1517 = vmatprep.subr.mxu0 0.0
    %v1518 = vand.u32 %v1219, 4294901760
    %v1519 = vsub.f32 %v1219, %v1518
    %1520 = vmatpush1.msra.mxu0 %v1519
    %1521 = vmatprep.subr.mxu0 0.0
    %v1522 = vand.u32 %v1220, 4294901760
    %v1523 = vsub.f32 %v1220, %v1522
    %1524 = vmatpush1.msra.mxu0 %v1523
    %1525 = vmatprep.subr.mxu0 0.0
    %v1526 = vand.u32 %v1221, 4294901760
    %v1527 = vsub.f32 %v1221, %v1526
    %1528 = vmatpush1.msra.mxu0 %v1527
    %1529 = vmatprep.subr.mxu0 0.0
    %v1530 = vand.u32 %v1222, 4294901760
    %v1531 = vsub.f32 %v1222, %v1530
    %1532 = vmatpush1.msra.mxu0 %v1531
    %1533 = vmatprep.subr.mxu0 0.0
    %1534 = vmatpush1.msra.mxu0 0.0
    %1535 = vmatprep.subr.mxu0 0.0
    %1536 = vmatpush1.msra.mxu0 0.0
    %1537 = vmatprep.subr.mxu0 0.0
    %1538 = vmatpush1.msra.mxu0 0.0
    %1539 = vmatprep.subr.mxu0 0.0
    %1540 = vmatpush1.msra.mxu0 0.0
    %1541 = vmatprep.subr.mxu0 0.0
    %1542 = vmatpush1.msra.mxu0 0.0
    %1543 = vmatprep.subr.mxu0 0.0
    %1544 = vmatpush1.msra.mxu0 0.0
    %1545 = vmatprep.subr.mxu0 0.0
    %1546 = vmatpush1.msra.mxu0 0.0
    %1547 = vmatprep.subr.mxu0 0.0
    %1548 = vmatpush1.msra.mxu0 0.0
    %1549 = vmatprep.subr.mxu0 0.0
    %1550 = vmatpush1.msra.mxu0 0.0
    %1551 = vmatprep.subr.mxu0 0.0
    %1552 = vmatpush1.msra.mxu0 0.0
    %1553 = vmatprep.subr.mxu0 0.0
    %1554 = vmatpush1.msra.mxu0 0.0
    %1555 = vmatprep.subr.mxu0 0.0
    %1556 = vmatpush1.msra.mxu0 0.0
    %1557 = vmatprep.subr.mxu0 0.0
    %1558 = vmatpush1.msra.mxu0 0.0
    %1559 = vmatprep.subr.mxu0 0.0
    %1560 = vmatpush1.msra.mxu0 0.0
    %1561 = vmatprep.subr.mxu0 0.0
    %1562 = vmatpush1.msra.mxu0 0.0
    %1563 = vmatprep.subr.mxu0 0.0
    %1564 = vmatpush1.msra.mxu0 0.0
    %1565 = vmatprep.mubr.f32.mxu0 0.0
    %v1566 = vand.u32 %v1206, 4294901760
    %v1567 = vsub.f32 %v1206, %v1566
    %1568 = vmatmul.mubr.f32.gmra.mrb[0].mxu0 %v1567
    %v1569 = vpop.f32.mrb[0].mxu0
    %v1570 = vadd.f32 %v1466, %v1569
    %v1571 = vpop.f32.mrb[0].mxu0
    %1572 = vdwg.mxu0
    %1573 = vmatprep.subr.mxu0 0.0
    %v1574 = vand.u32 %v1207, 4294901760
    %1575 = vmatpush1.msra.mxu0 %v1574
    %1576 = vmatprep.subr.mxu0 0.0
    %v1577 = vand.u32 %v1208, 4294901760
    %1578 = vmatpush1.msra.mxu0 %v1577
    %1579 = vmatprep.subr.mxu0 0.0
    %v1580 = vand.u32 %v1209, 4294901760
    %1581 = vmatpush1.msra.mxu0 %v1580
    %1582 = vmatprep.subr.mxu0 0.0
    %v1583 = vand.u32 %v1210, 4294901760
    %1584 = vmatpush1.msra.mxu0 %v1583
    %1585 = vmatprep.subr.mxu0 0.0
    %v1586 = vand.u32 %v1211, 4294901760
    %1587 = vmatpush1.msra.mxu0 %v1586
    %1588 = vmatprep.subr.mxu0 0.0
    %v1589 = vand.u32 %v1212, 4294901760
    %1590 = vmatpush1.msra.mxu0 %v1589
    %1591 = vmatprep.subr.mxu0 0.0
    %v1592 = vand.u32 %v1213, 4294901760
    %1593 = vmatpush1.msra.mxu0 %v1592
    %1594 = vmatprep.subr.mxu0 0.0
    %v1595 = vand.u32 %v1214, 4294901760
    %1596 = vmatpush1.msra.mxu0 %v1595
    %1597 = vmatprep.subr.mxu0 0.0
    %v1598 = vand.u32 %v1215, 4294901760
    %1599 = vmatpush1.msra.mxu0 %v1598
    %1600 = vmatprep.subr.mxu0 0.0
    %v1601 = vand.u32 %v1216, 4294901760
    %1602 = vmatpush1.msra.mxu0 %v1601
    %1603 = vmatprep.subr.mxu0 0.0
    %v1604 = vand.u32 %v1217, 4294901760
    %1605 = vmatpush1.msra.mxu0 %v1604
    %1606 = vmatprep.subr.mxu0 0.0
    %v1607 = vand.u32 %v1218, 4294901760
    %1608 = vmatpush1.msra.mxu0 %v1607
    %1609 = vmatprep.subr.mxu0 0.0
    %v1610 = vand.u32 %v1219, 4294901760
    %1611 = vmatpush1.msra.mxu0 %v1610
    %1612 = vmatprep.subr.mxu0 0.0
    %v1613 = vand.u32 %v1220, 4294901760
    %1614 = vmatpush1.msra.mxu0 %v1613
    %1615 = vmatprep.subr.mxu0 0.0
    %v1616 = vand.u32 %v1221, 4294901760
    %1617 = vmatpush1.msra.mxu0 %v1616
    %1618 = vmatprep.subr.mxu0 0.0
    %v1619 = vand.u32 %v1222, 4294901760
    %1620 = vmatpush1.msra.mxu0 %v1619
    %1621 = vmatprep.subr.mxu0 0.0
    %1622 = vmatpush1.msra.mxu0 0.0
    %1623 = vmatprep.subr.mxu0 0.0
    %1624 = vmatpush1.msra.mxu0 0.0
    %1625 = vmatprep.subr.mxu0 0.0
    %1626 = vmatpush1.msra.mxu0 0.0
    %1627 = vmatprep.subr.mxu0 0.0
    %1628 = vmatpush1.msra.mxu0 0.0
    %1629 = vmatprep.subr.mxu0 0.0
    %1630 = vmatpush1.msra.mxu0 0.0
    %1631 = vmatprep.subr.mxu0 0.0
    %1632 = vmatpush1.msra.mxu0 0.0
    %1633 = vmatprep.subr.mxu0 0.0
    %1634 = vmatpush1.msra.mxu0 0.0
    %1635 = vmatprep.subr.mxu0 0.0
    %1636 = vmatpush1.msra.mxu0 0.0
    %1637 = vmatprep.subr.mxu0 0.0
    %1638 = vmatpush1.msra.mxu0 0.0
    %1639 = vmatprep.subr.mxu0 0.0
    %1640 = vmatpush1.msra.mxu0 0.0
    %1641 = vmatprep.subr.mxu0 0.0
    %1642 = vmatpush1.msra.mxu0 0.0
    %1643 = vmatprep.subr.mxu0 0.0
    %1644 = vmatpush1.msra.mxu0 0.0
    %1645 = vmatprep.subr.mxu0 0.0
    %1646 = vmatpush1.msra.mxu0 0.0
    %1647 = vmatprep.subr.mxu0 0.0
    %1648 = vmatpush1.msra.mxu0 0.0
    %1649 = vmatprep.subr.mxu0 0.0
    %1650 = vmatpush1.msra.mxu0 0.0
    %1651 = vmatprep.subr.mxu0 0.0
    %1652 = vmatpush1.msra.mxu0 0.0
    %1653 = vmatprep.mubr.f32.mxu0 0.0
    %v1654 = vand.u32 %v1206, 4294901760
    %v1655 = vsub.f32 %v1206, %v1654
    %v1656 = vand.u32 %v1655, 4294901760
    %1657 = vmatmul.mubr.f32.gmra.mrb[0].mxu0 %v1656
    %v1658 = vpop.f32.mrb[0].mxu0
    %v1659 = vadd.f32 %v1570, %v1658
    %v1660 = vpop.f32.mrb[0].mxu0
    %1661 = vdwg.mxu0
    %1662 = vmatprep.subr.mxu0 0.0
    %v1663 = vand.u32 %v1207, 4294901760
    %v1664 = vsub.f32 %v1207, %v1663
    %v1665 = vand.u32 %v1664, 4294901760
    %1666 = vmatpush1.msra.mxu0 %v1665
    %1667 = vmatprep.subr.mxu0 0.0
    %v1668 = vand.u32 %v1208, 4294901760
    %v1669 = vsub.f32 %v1208, %v1668
    %v1670 = vand.u32 %v1669, 4294901760
    %1671 = vmatpush1.msra.mxu0 %v1670
    %1672 = vmatprep.subr.mxu0 0.0
    %v1673 = vand.u32 %v1209, 4294901760
    %v1674 = vsub.f32 %v1209, %v1673
    %v1675 = vand.u32 %v1674, 4294901760
    %1676 = vmatpush1.msra.mxu0 %v1675
    %1677 = vmatprep.subr.mxu0 0.0
    %v1678 = vand.u32 %v1210, 4294901760
    %v1679 = vsub.f32 %v1210, %v1678
    %v1680 = vand.u32 %v1679, 4294901760
    %1681 = vmatpush1.msra.mxu0 %v1680
    %1682 = vmatprep.subr.mxu0 0.0
    %v1683 = vand.u32 %v1211, 4294901760
    %v1684 = vsub.f32 %v1211, %v1683
    %v1685 = vand.u32 %v1684, 4294901760
    %1686 = vmatpush1.msra.mxu0 %v1685
    %1687 = vmatprep.subr.mxu0 0.0
    %v1688 = vand.u32 %v1212, 4294901760
    %v1689 = vsub.f32 %v1212, %v1688
    %v1690 = vand.u32 %v1689, 4294901760
    %1691 = vmatpush1.msra.mxu0 %v1690
    %1692 = vmatprep.subr.mxu0 0.0
    %v1693 = vand.u32 %v1213, 4294901760
    %v1694 = vsub.f32 %v1213, %v1693
    %v1695 = vand.u32 %v1694, 4294901760
    %1696 = vmatpush1.msra.mxu0 %v1695
    %1697 = vmatprep.subr.mxu0 0.0
    %v1698 = vand.u32 %v1214, 4294901760
    %v1699 = vsub.f32 %v1214, %v1698
    %v1700 = vand.u32 %v1699, 4294901760
    %1701 = vmatpush1.msra.mxu0 %v1700
    %1702 = vmatprep.subr.mxu0 0.0
    %v1703 = vand.u32 %v1215, 4294901760
    %v1704 = vsub.f32 %v1215, %v1703
    %v1705 = vand.u32 %v1704, 4294901760
    %1706 = vmatpush1.msra.mxu0 %v1705
    %1707 = vmatprep.subr.mxu0 0.0
    %v1708 = vand.u32 %v1216, 4294901760
    %v1709 = vsub.f32 %v1216, %v1708
    %v1710 = vand.u32 %v1709, 4294901760
    %1711 = vmatpush1.msra.mxu0 %v1710
    %1712 = vmatprep.subr.mxu0 0.0
    %v1713 = vand.u32 %v1217, 4294901760
    %v1714 = vsub.f32 %v1217, %v1713
    %v1715 = vand.u32 %v1714, 4294901760
    %1716 = vmatpush1.msra.mxu0 %v1715
    %1717 = vmatprep.subr.mxu0 0.0
    %v1718 = vand.u32 %v1218, 4294901760
    %v1719 = vsub.f32 %v1218, %v1718
    %v1720 = vand.u32 %v1719, 4294901760
    %1721 = vmatpush1.msra.mxu0 %v1720
    %1722 = vmatprep.subr.mxu0 0.0
    %v1723 = vand.u32 %v1219, 4294901760
    %v1724 = vsub.f32 %v1219, %v1723
    %v1725 = vand.u32 %v1724, 4294901760
    %1726 = vmatpush1.msra.mxu0 %v1725
    %1727 = vmatprep.subr.mxu0 0.0
    %v1728 = vand.u32 %v1220, 4294901760
    %v1729 = vsub.f32 %v1220, %v1728
    %v1730 = vand.u32 %v1729, 4294901760
    %1731 = vmatpush1.msra.mxu0 %v1730
    %1732 = vmatprep.subr.mxu0 0.0
    %v1733 = vand.u32 %v1221, 4294901760
    %v1734 = vsub.f32 %v1221, %v1733
    %v1735 = vand.u32 %v1734, 4294901760
    %1736 = vmatpush1.msra.mxu0 %v1735
    %1737 = vmatprep.subr.mxu0 0.0
    %v1738 = vand.u32 %v1222, 4294901760
    %v1739 = vsub.f32 %v1222, %v1738
    %v1740 = vand.u32 %v1739, 4294901760
    %1741 = vmatpush1.msra.mxu0 %v1740
    %1742 = vmatprep.subr.mxu0 0.0
    %1743 = vmatpush1.msra.mxu0 0.0
    %1744 = vmatprep.subr.mxu0 0.0
    %1745 = vmatpush1.msra.mxu0 0.0
    %1746 = vmatprep.subr.mxu0 0.0
    %1747 = vmatpush1.msra.mxu0 0.0
    %1748 = vmatprep.subr.mxu0 0.0
    %1749 = vmatpush1.msra.mxu0 0.0
    %1750 = vmatprep.subr.mxu0 0.0
    %1751 = vmatpush1.msra.mxu0 0.0
    %1752 = vmatprep.subr.mxu0 0.0
    %1753 = vmatpush1.msra.mxu0 0.0
    %1754 = vmatprep.subr.mxu0 0.0
    %1755 = vmatpush1.msra.mxu0 0.0
    %1756 = vmatprep.subr.mxu0 0.0
    %1757 = vmatpush1.msra.mxu0 0.0
    %1758 = vmatprep.subr.mxu0 0.0
    %1759 = vmatpush1.msra.mxu0 0.0
    %1760 = vmatprep.subr.mxu0 0.0
    %1761 = vmatpush1.msra.mxu0 0.0
    %1762 = vmatprep.subr.mxu0 0.0
    %1763 = vmatpush1.msra.mxu0 0.0
    %1764 = vmatprep.subr.mxu0 0.0
    %1765 = vmatpush1.msra.mxu0 0.0
    %1766 = vmatprep.subr.mxu0 0.0
    %1767 = vmatpush1.msra.mxu0 0.0
    %1768 = vmatprep.subr.mxu0 0.0
    %1769 = vmatpush1.msra.mxu0 0.0
    %1770 = vmatprep.subr.mxu0 0.0
    %1771 = vmatpush1.msra.mxu0 0.0
    %1772 = vmatprep.subr.mxu0 0.0
    %1773 = vmatpush1.msra.mxu0 0.0
    %1774 = vmatprep.mubr.f32.mxu0 0.0
    %v1775 = vand.u32 %v1206, 4294901760
    %1776 = vmatmul.mubr.f32.gmra.mrb[0].mxu0 %v1775
    %v1777 = vpop.f32.mrb[0].mxu0
    %v1778 = vadd.f32 %v1659, %v1777
    %v1779 = vpop.f32.mrb[0].mxu0
    %1780 = vdwg.mxu0
    %1781 = vmatprep.subr.mxu0 0.0
    %v1782 = vand.u32 %v1207, 4294901760
    %1783 = vmatpush1.msra.mxu0 %v1782
    %1784 = vmatprep.subr.mxu0 0.0
    %v1785 = vand.u32 %v1208, 4294901760
    %1786 = vmatpush1.msra.mxu0 %v1785
    %1787 = vmatprep.subr.mxu0 0.0
    %v1788 = vand.u32 %v1209, 4294901760
    %1789 = vmatpush1.msra.mxu0 %v1788
    %1790 = vmatprep.subr.mxu0 0.0
    %v1791 = vand.u32 %v1210, 4294901760
    %1792 = vmatpush1.msra.mxu0 %v1791
    %1793 = vmatprep.subr.mxu0 0.0
    %v1794 = vand.u32 %v1211, 4294901760
    %1795 = vmatpush1.msra.mxu0 %v1794
    %1796 = vmatprep.subr.mxu0 0.0
    %v1797 = vand.u32 %v1212, 4294901760
    %1798 = vmatpush1.msra.mxu0 %v1797
    %1799 = vmatprep.subr.mxu0 0.0
    %v1800 = vand.u32 %v1213, 4294901760
    %1801 = vmatpush1.msra.mxu0 %v1800
    %1802 = vmatprep.subr.mxu0 0.0
    %v1803 = vand.u32 %v1214, 4294901760
    %1804 = vmatpush1.msra.mxu0 %v1803
    %1805 = vmatprep.subr.mxu0 0.0
    %v1806 = vand.u32 %v1215, 4294901760
    %1807 = vmatpush1.msra.mxu0 %v1806
    %1808 = vmatprep.subr.mxu0 0.0
    %v1809 = vand.u32 %v1216, 4294901760
    %1810 = vmatpush1.msra.mxu0 %v1809
    %1811 = vmatprep.subr.mxu0 0.0
    %v1812 = vand.u32 %v1217, 4294901760
    %1813 = vmatpush1.msra.mxu0 %v1812
    %1814 = vmatprep.subr.mxu0 0.0
    %v1815 = vand.u32 %v1218, 4294901760
    %1816 = vmatpush1.msra.mxu0 %v1815
    %1817 = vmatprep.subr.mxu0 0.0
    %v1818 = vand.u32 %v1219, 4294901760
    %1819 = vmatpush1.msra.mxu0 %v1818
    %1820 = vmatprep.subr.mxu0 0.0
    %v1821 = vand.u32 %v1220, 4294901760
    %1822 = vmatpush1.msra.mxu0 %v1821
    %1823 = vmatprep.subr.mxu0 0.0
    %v1824 = vand.u32 %v1221, 4294901760
    %1825 = vmatpush1.msra.mxu0 %v1824
    %1826 = vmatprep.subr.mxu0 0.0
    %v1827 = vand.u32 %v1222, 4294901760
    %1828 = vmatpush1.msra.mxu0 %v1827
    %1829 = vmatprep.subr.mxu0 0.0
    %1830 = vmatpush1.msra.mxu0 0.0
    %1831 = vmatprep.subr.mxu0 0.0
    %1832 = vmatpush1.msra.mxu0 0.0
    %1833 = vmatprep.subr.mxu0 0.0
    %1834 = vmatpush1.msra.mxu0 0.0
    %1835 = vmatprep.subr.mxu0 0.0
    %1836 = vmatpush1.msra.mxu0 0.0
    %1837 = vmatprep.subr.mxu0 0.0
    %1838 = vmatpush1.msra.mxu0 0.0
    %1839 = vmatprep.subr.mxu0 0.0
    %1840 = vmatpush1.msra.mxu0 0.0
    %1841 = vmatprep.subr.mxu0 0.0
    %1842 = vmatpush1.msra.mxu0 0.0
    %1843 = vmatprep.subr.mxu0 0.0
    %1844 = vmatpush1.msra.mxu0 0.0
    %1845 = vmatprep.subr.mxu0 0.0
    %1846 = vmatpush1.msra.mxu0 0.0
    %1847 = vmatprep.subr.mxu0 0.0
    %1848 = vmatpush1.msra.mxu0 0.0
    %1849 = vmatprep.subr.mxu0 0.0
    %1850 = vmatpush1.msra.mxu0 0.0
    %1851 = vmatprep.subr.mxu0 0.0
    %1852 = vmatpush1.msra.mxu0 0.0
    %1853 = vmatprep.subr.mxu0 0.0
    %1854 = vmatpush1.msra.mxu0 0.0
    %1855 = vmatprep.subr.mxu0 0.0
    %1856 = vmatpush1.msra.mxu0 0.0
    %1857 = vmatprep.subr.mxu0 0.0
    %1858 = vmatpush1.msra.mxu0 0.0
    %1859 = vmatprep.subr.mxu0 0.0
    %1860 = vmatpush1.msra.mxu0 0.0
    %1861 = vmatprep.mubr.f32.mxu0 0.0
    %v1862 = vand.u32 %v1206, 4294901760
    %1863 = vmatmul.mubr.f32.gmra.mrb[0].mxu0 %v1862
    %v1864 = vpop.f32.mrb[0].mxu0
    %v1865 = vadd.f32 %v1778, %v1864
    %v1866 = vpop.f32.mrb[0].mxu0
    %1867 = vdwg.mxu0
    %vm1868 = vcmask 31744
    %1869 = vst.msk [vmem:[%s5] sm:$0xff] %vm1868, %v1865
    // Predicated region
    $region38: #{_dqn_forward_jit.1} parent=1 // pred_check
      _
    $region39: #{_dqn_forward_jit.1} parent=1 // pred_check_branch
      %1871 = sbr.rel (0) target = $region41
    $region40: #{_dqn_forward_jit.1} parent=1 // pred_region
      _
    $region41: #{_dqn_forward_jit.1} parent=1 // pred_fallthru
      _
    // Predicated region
    $region42: #{_dqn_forward_jit.1} parent=1 // pred_check
      _
    $region43: #{_dqn_forward_jit.1} parent=1 // pred_check_branch
      %1873 = sbr.rel (0) target = $region45
    $region44: #{_dqn_forward_jit.1} parent=1 // pred_region
      _
    $region45: #{_dqn_forward_jit.1} parent=1 // pred_fallthru
      _
    %1874 = vsyncpa [#allocation3], 1
    %1875 = vsyncpa [#allocation5], 1
    %1876 = vsyncpa [#allocation8], 1

</llo_original>
